<compile_context>
chip_gen: v7x
topology: tpu7x:2x2x1
jax: 0.10.0
libtpu: 0.0.40
codegen_flags: <defaults>
</compile_context>

<pallas_src>
import jax
import jax.numpy as jnp
from jax.experimental import pallas as pl
from jax.experimental.pallas import tpu as pltpu


def lstm_kernel(xp_ref, w_hh_ref, w_fc_ref, b_fc_ref,
                out_ref, y_ref, h_scr, c_scr):
    """One grid step = one block of Tb timesteps of the LSTM recurrence.

    xp_ref  : (B, Tb, 4H) precomputed x_t @ W_ih^T + (b_ih + b_hh)
    w_hh_ref: (H, 4H)     recurrent weights (transposed), resident
    w_fc_ref: (H, O), b_fc_ref: (1, O)  final Linear head, resident
    out_ref : (B, Tb, H)  per-timestep hidden states (batch_first block)
    y_ref   : (B, O)      fc(output[:, -1])
    h_scr/c_scr: (B, H)   recurrent state, persists across grid steps
    """
    blk = pl.program_id(0)

    # h0 = c0 = 0; also pre-write the head output block so it is always defined.
    @pl.when(blk == 0)
    def _init():
        h_scr[...] = jnp.zeros_like(h_scr)
        c_scr[...] = jnp.zeros_like(c_scr)
        y_ref[...] = jnp.zeros_like(y_ref)

    tb_steps = xp_ref.shape[1]          # static Python int (block size Tb)
    H = h_scr.shape[-1]

    w_hh = w_hh_ref[...]                # hoisted: loaded once per grid step
    h = h_scr[...]
    c = c_scr[...]

    # Fully-unrolled static inner loop over the Tb timesteps of this block.  The serial
    # critical path is only the (B,H)x(H,4H) recurrent matmul plus gate math; all
    # indices below are compile-time constants (static slices).
    for s in range(tb_steps):
        gates = xp_ref[:, s, :] + jnp.dot(h, w_hh,
                                          preferred_element_type=jnp.float32)
        i_g = jax.nn.sigmoid(gates[:, 0 * H:1 * H])   # PyTorch gate order [i, f, g, o]
        f_g = jax.nn.sigmoid(gates[:, 1 * H:2 * H])
        g_g = jnp.tanh(gates[:, 2 * H:3 * H])
        o_g = jax.nn.sigmoid(gates[:, 3 * H:4 * H])
        c = f_g * c + i_g * g_g
        h = o_g * jnp.tanh(c)
        out_ref[:, s, :] = h            # store into the resident VMEM output block

    h_scr[...] = h
    c_scr[...] = c

    # fc head on output[:, -1]  (== h after the final timestep of the last block)
    @pl.when(blk == pl.num_programs(0) - 1)
    def _head():
        y_ref[...] = (jnp.dot(h, w_fc_ref[...],
                              preferred_element_type=jnp.float32)
                      + b_fc_ref[...])


def _pick_block_t(T, max_unroll=64):
    """Timesteps per grid step: divides T and is either == T or a multiple of 8."""
    if T <= max_unroll:
        return T
    best = 0
    for tb in range(8, max_unroll + 1, 8):
        if T % tb == 0:
            best = tb
    return best if best else T


@jax.jit
def lstm_forward(x, w_ih, w_hh, b_ih, b_hh, w_fc, b_fc):
    """x: (B, T, D) batch_first.  PyTorch-layout weights:
       w_ih (4H, D), w_hh (4H, H), b_ih/b_hh (4H,), w_fc (O, H), b_fc (O,).
       Returns (output (B, T, H), fc(output[:, -1]) (B, O))."""
    B, T, D = x.shape
    H = w_hh.shape[1]
    O = w_fc.shape[0]
    Tb = _pick_block_t(T)
    assert T % Tb == 0

    # (1) Hoisted input projection: one (B*T, D) x (D, 4H) matmul for the whole sequence
    #     with the fused LSTM bias folded in.  batch_first layout is kept, so there are
    #     no extra transpose passes over x in HBM.
    w_ih_t = jnp.transpose(w_ih)                            # (D, 4H)
    bias = (b_ih + b_hh).reshape(1, 1, 4 * H)
    x_proj = jnp.matmul(x, w_ih_t) + bias                   # (B, T, 4H) float32

    w_hh_t = jnp.transpose(w_hh)                            # (H, 4H)
    w_fc_t = jnp.transpose(w_fc)                            # (H, O)
    b_fc_r = b_fc.reshape(1, O)                             # (1, O)

    out_seq, y = pl.pallas_call(
        lstm_kernel,
        out_shape=(jax.ShapeDtypeStruct((B, T, H), jnp.float32),
                   jax.ShapeDtypeStruct((B, O), jnp.float32)),
        grid_spec=pltpu.PrefetchScalarGridSpec(
            num_scalar_prefetch=0,
            grid=(T // Tb,),
            in_specs=[
                pl.BlockSpec((B, Tb, 4 * H), lambda t: (0, t, 0)),  # X_proj block
                pl.BlockSpec((H, 4 * H), lambda t: (0, 0)),         # W_hh^T (resident)
                pl.BlockSpec((H, O), lambda t: (0, 0)),             # W_fc^T (resident)
                pl.BlockSpec((1, O), lambda t: (0, 0)),             # b_fc   (resident)
            ],
            out_specs=[
                pl.BlockSpec((B, Tb, H), lambda t: (0, t, 0)),      # hidden states
                pl.BlockSpec((B, O), lambda t: (0, 0)),             # fc(output[:, -1])
            ],
            scratch_shapes=[
                pltpu.VMEM((B, H), jnp.float32),    # h state (persists across blocks)
                pltpu.VMEM((B, H), jnp.float32),    # c state
            ],
        ),
        compiler_params=pltpu.CompilerParams(
            dimension_semantics=("arbitrary",)),    # time blocks are strictly sequential
    )(x_proj, w_hh_t, w_fc_t, b_fc_r)

    return out_seq, y


def lstm_ref(x, w_ih, w_hh, b_ih, b_hh, w_fc, b_fc):
    """Pure-JAX reference (matches torch.nn.LSTM + Linear semantics)."""
    B, T, D = x.shape
    H = w_hh.shape[1]

    def step(carry, x_t):
        h, c = carry
        gates = x_t @ w_ih.T + b_ih + h @ w_hh.T + b_hh
        i, f, g, o = jnp.split(gates, 4, axis=-1)
        i, f, o = jax.nn.sigmoid(i), jax.nn.sigmoid(f), jax.nn.sigmoid(o)
        g = jnp.tanh(g)
        c = f * c + i * g
        h = o * jnp.tanh(c)
        return (h, c), h

    init = (jnp.zeros((B, H), jnp.float32), jnp.zeros((B, H), jnp.float32))
    _, outs = jax.lax.scan(step, init, jnp.swapaxes(x, 0, 1))
    outs = jnp.swapaxes(outs, 0, 1)                  # (B, T, H)
    y = outs[:, -1] @ w_fc.T + b_fc
    return outs, y


if __name__ == "__main__":
    # Small shapes consistent with the module: hidden_dim=2, output_dim=1.
    B, T, D, H, O = 2, 8, 4, 2, 1

    key = jax.random.PRNGKey(0)
    k = jax.random.split(key, 8)
    x = jax.random.normal(k[0], (B, T, D), jnp.float32)

    s = 0.5
    w_ih = jax.random.normal(k[1], (4 * H, D), jnp.float32) * s   # torch weight_ih_l0
    w_hh = jax.random.normal(k[2], (4 * H, H), jnp.float32) * s   # torch weight_hh_l0
    b_ih = jax.random.normal(k[3], (4 * H,), jnp.float32) * s
    b_hh = jax.random.normal(k[4], (4 * H,), jnp.float32) * s
    w_fc = jax.random.normal(k[5], (O, H), jnp.float32) * s       # torch fc.weight
    b_fc = jax.random.normal(k[6], (O,), jnp.float32) * s         # torch fc.bias

    out_seq, y = lstm_forward(x, w_ih, w_hh, b_ih, b_hh, w_fc, b_fc)
    jax.block_until_ready((out_seq, y))

    out_ref_seq, y_ref = lstm_ref(x, w_ih, w_hh, b_ih, b_hh, w_fc, b_fc)
    assert jnp.allclose(out_seq, out_ref_seq, atol=1e-5, rtol=1e-5), "LSTM output mismatch"
    assert jnp.allclose(y, y_ref, atol=1e-5, rtol=1e-5), "FC head mismatch"

    print("KERNEL_OK")
</pallas_src>

<mosaic_0001>
module attributes {stable_mosaic.version = 11 : i64} {
  func.func @lstm_kernel(%arg0: i32, %arg1: memref<2x8x8xf32, #tpu.memory_space<vmem>>, %arg2: memref<2x8xf32, #tpu.memory_space<vmem>>, %arg3: memref<2x1xf32, #tpu.memory_space<vmem>>, %arg4: memref<1x1xf32, #tpu.memory_space<vmem>>, %arg5: memref<2x8x2xf32, #tpu.memory_space<vmem>>, %arg6: memref<2x1xf32, #tpu.memory_space<vmem>>, %arg7: memref<2x2xf32, #tpu.memory_space<vmem>>, %arg8: memref<2x2xf32, #tpu.memory_space<vmem>>) attributes {dimension_semantics = [#tpu.dimension_semantics<arbitrary>], iteration_bounds = array<i64: 1>, scalar_prefetch = 0 : i64, scratch_operands = 2 : i64, tpu.core_type = #tpu.core_type<tc>, window_params = [{transform_indices = @transform_0, window_bounds = array<i64: 2, 8, 8>}, {pipeline_mode = #tpu.pipeline_mode<synchronous>, transform_indices = @transform_1, window_bounds = array<i64: 2, 8>}, {pipeline_mode = #tpu.pipeline_mode<synchronous>, transform_indices = @transform_2, window_bounds = array<i64: 2, 1>}, {pipeline_mode = #tpu.pipeline_mode<synchronous>, transform_indices = @transform_3, window_bounds = array<i64: 1, 1>}, {transform_indices = @transform_4, window_bounds = array<i64: 2, 8, 2>}, {pipeline_mode = #tpu.pipeline_mode<synchronous>, transform_indices = @transform_5, window_bounds = array<i64: 2, 1>}]} {
    %c0_i32 = arith.constant 0 : i32
    %0 = arith.cmpi eq, %arg0, %c0_i32 : i32
    %1 = arith.extui %0 : i1 to i32
    %c0_i32_0 = arith.constant 0 : i32
    %2 = arith.cmpi ne, %1, %c0_i32_0 : i32
    scf.if %2 {
      %cst_84 = arith.constant 0.000000e+00 : f32
      %267 = vector.broadcast %cst_84 : f32 to vector<2x2xf32>
      %c0_85 = arith.constant 0 : index
      %c0_86 = arith.constant 0 : index
      %268 = vector.load %arg7[%c0_85, %c0_86] : memref<2x2xf32, #tpu.memory_space<vmem>>, vector<2x2xf32>
      tpu.vector_store %arg7[%c0_85, %c0_86], %267 {strides = array<i32>} : memref<2x2xf32, #tpu.memory_space<vmem>>, vector<2x2xf32>,
      %cst_87 = arith.constant 0.000000e+00 : f32
      %269 = vector.broadcast %cst_87 : f32 to vector<2x2xf32>
      %c0_88 = arith.constant 0 : index
      %c0_89 = arith.constant 0 : index
      %270 = vector.load %arg8[%c0_88, %c0_89] : memref<2x2xf32, #tpu.memory_space<vmem>>, vector<2x2xf32>
      tpu.vector_store %arg8[%c0_88, %c0_89], %269 {strides = array<i32>} : memref<2x2xf32, #tpu.memory_space<vmem>>, vector<2x2xf32>,
      %cst_90 = arith.constant 0.000000e+00 : f32
      %271 = vector.broadcast %cst_90 : f32 to vector<2x1xf32>
      %c0_91 = arith.constant 0 : index
      %c0_92 = arith.constant 0 : index
      %272 = vector.load %arg6[%c0_91, %c0_92] : memref<2x1xf32, #tpu.memory_space<vmem>>, vector<2x1xf32>
      tpu.vector_store %arg6[%c0_91, %c0_92], %271 {strides = array<i32>} : memref<2x1xf32, #tpu.memory_space<vmem>>, vector<2x1xf32>,
    } else {
    }
    %c0 = arith.constant 0 : index
    %c0_1 = arith.constant 0 : index
    %3 = vector.load %arg2[%c0, %c0_1] : memref<2x8xf32, #tpu.memory_space<vmem>>, vector<2x8xf32>
    %c0_2 = arith.constant 0 : index
    %c0_3 = arith.constant 0 : index
    %4 = vector.load %arg7[%c0_2, %c0_3] : memref<2x2xf32, #tpu.memory_space<vmem>>, vector<2x2xf32>
    %c0_4 = arith.constant 0 : index
    %c0_5 = arith.constant 0 : index
    %5 = vector.load %arg8[%c0_4, %c0_5] : memref<2x2xf32, #tpu.memory_space<vmem>>, vector<2x2xf32>
    %c0_6 = arith.constant 0 : index
    %c0_7 = arith.constant 0 : index
    %c0_8 = arith.constant 0 : index
    %6 = vector.load %arg1[%c0_6, %c0_7, %c0_8] : memref<2x8x8xf32, #tpu.memory_space<vmem>>, vector<2x1x8xf32>
    %7 = vector.shape_cast %6 : vector<2x1x8xf32> to vector<2x8xf32>
    %cst = arith.constant dense<0.000000e+00> : vector<2x8xf32>
    %8 = tpu.matmul %4, %3, %cst {dimension_numbers = #tpu.dot_dimension_numbers<[1], [0], [0], [1], [0, 0, 1, 1], [], []>} : vector<2x2xf32>, vector<2x8xf32>, vector<2x8xf32> -> vector<2x8xf32>
    %9 = arith.addf %7, %8 : vector<2x8xf32>
    %10 = vector.extract_strided_slice %9 {offsets = [0, 0], sizes = [2, 2], strides = [1, 1]} : vector<2x8xf32> to vector<2x2xf32>
    %11 = arith.negf %10 : vector<2x2xf32>
    %12 = math.exp %11 : vector<2x2xf32>
    %cst_9 = arith.constant 1.000000e+00 : f32
    %13 = vector.broadcast %cst_9 : f32 to vector<2x2xf32>
    %14 = arith.addf %13, %12 : vector<2x2xf32>
    %15 = arith.divf %13, %14 : vector<2x2xf32>
    %16 = vector.extract_strided_slice %9 {offsets = [0, 2], sizes = [2, 2], strides = [1, 1]} : vector<2x8xf32> to vector<2x2xf32>
    %17 = arith.negf %16 : vector<2x2xf32>
    %18 = math.exp %17 : vector<2x2xf32>
    %cst_10 = arith.constant 1.000000e+00 : f32
    %19 = vector.broadcast %cst_10 : f32 to vector<2x2xf32>
    %20 = arith.addf %19, %18 : vector<2x2xf32>
    %21 = arith.divf %19, %20 : vector<2x2xf32>
    %22 = vector.extract_strided_slice %9 {offsets = [0, 4], sizes = [2, 2], strides = [1, 1]} : vector<2x8xf32> to vector<2x2xf32>
    %23 = math.tanh %22 : vector<2x2xf32>
    %24 = vector.extract_strided_slice %9 {offsets = [0, 6], sizes = [2, 2], strides = [1, 1]} : vector<2x8xf32> to vector<2x2xf32>
    %25 = arith.negf %24 : vector<2x2xf32>
    %26 = math.exp %25 : vector<2x2xf32>
    %cst_11 = arith.constant 1.000000e+00 : f32
    %27 = vector.broadcast %cst_11 : f32 to vector<2x2xf32>
    %28 = arith.addf %27, %26 : vector<2x2xf32>
    %29 = arith.divf %27, %28 : vector<2x2xf32>
    %30 = arith.mulf %21, %5 : vector<2x2xf32>
    %31 = arith.mulf %15, %23 : vector<2x2xf32>
    %32 = arith.addf %30, %31 : vector<2x2xf32>
    %33 = math.tanh %32 : vector<2x2xf32>
    %34 = arith.mulf %29, %33 : vector<2x2xf32>
    %c0_12 = arith.constant 0 : index
    %c0_13 = arith.constant 0 : index
    %c0_14 = arith.constant 0 : index
    %35 = vector.load %arg5[%c0_12, %c0_13, %c0_14] : memref<2x8x2xf32, #tpu.memory_space<vmem>>, vector<2x1x2xf32>
    %36 = vector.shape_cast %35 : vector<2x1x2xf32> to vector<2x2xf32>
    %37 = vector.shape_cast %34 : vector<2x2xf32> to vector<2x1x2xf32>
    tpu.vector_store %arg5[%c0_12, %c0_13, %c0_14], %37 {strides = array<i32>} : memref<2x8x2xf32, #tpu.memory_space<vmem>>, vector<2x1x2xf32>,
    %c0_15 = arith.constant 0 : index
    %c1 = arith.constant 1 : index
    %c0_16 = arith.constant 0 : index
    %38 = vector.load %arg1[%c0_15, %c1, %c0_16] : memref<2x8x8xf32, #tpu.memory_space<vmem>>, vector<2x1x8xf32>
    %39 = vector.shape_cast %38 : vector<2x1x8xf32> to vector<2x8xf32>
    %cst_17 = arith.constant dense<0.000000e+00> : vector<2x8xf32>
    %40 = tpu.matmul %34, %3, %cst_17 {dimension_numbers = #tpu.dot_dimension_numbers<[1], [0], [0], [1], [0, 0, 1, 1], [], []>} : vector<2x2xf32>, vector<2x8xf32>, vector<2x8xf32> -> vector<2x8xf32>
    %41 = arith.addf %39, %40 : vector<2x8xf32>
    %42 = vector.extract_strided_slice %41 {offsets = [0, 0], sizes = [2, 2], strides = [1, 1]} : vector<2x8xf32> to vector<2x2xf32>
    %43 = arith.negf %42 : vector<2x2xf32>
    %44 = math.exp %43 : vector<2x2xf32>
    %cst_18 = arith.constant 1.000000e+00 : f32
    %45 = vector.broadcast %cst_18 : f32 to vector<2x2xf32>
    %46 = arith.addf %45, %44 : vector<2x2xf32>
    %47 = arith.divf %45, %46 : vector<2x2xf32>
    %48 = vector.extract_strided_slice %41 {offsets = [0, 2], sizes = [2, 2], strides = [1, 1]} : vector<2x8xf32> to vector<2x2xf32>
    %49 = arith.negf %48 : vector<2x2xf32>
    %50 = math.exp %49 : vector<2x2xf32>
    %cst_19 = arith.constant 1.000000e+00 : f32
    %51 = vector.broadcast %cst_19 : f32 to vector<2x2xf32>
    %52 = arith.addf %51, %50 : vector<2x2xf32>
    %53 = arith.divf %51, %52 : vector<2x2xf32>
    %54 = vector.extract_strided_slice %41 {offsets = [0, 4], sizes = [2, 2], strides = [1, 1]} : vector<2x8xf32> to vector<2x2xf32>
    %55 = math.tanh %54 : vector<2x2xf32>
    %56 = vector.extract_strided_slice %41 {offsets = [0, 6], sizes = [2, 2], strides = [1, 1]} : vector<2x8xf32> to vector<2x2xf32>
    %57 = arith.negf %56 : vector<2x2xf32>
    %58 = math.exp %57 : vector<2x2xf32>
    %cst_20 = arith.constant 1.000000e+00 : f32
    %59 = vector.broadcast %cst_20 : f32 to vector<2x2xf32>
    %60 = arith.addf %59, %58 : vector<2x2xf32>
    %61 = arith.divf %59, %60 : vector<2x2xf32>
    %62 = arith.mulf %53, %32 : vector<2x2xf32>
    %63 = arith.mulf %47, %55 : vector<2x2xf32>
    %64 = arith.addf %62, %63 : vector<2x2xf32>
    %65 = math.tanh %64 : vector<2x2xf32>
    %66 = arith.mulf %61, %65 : vector<2x2xf32>
    %c0_21 = arith.constant 0 : index
    %c1_22 = arith.constant 1 : index
    %c0_23 = arith.constant 0 : index
    %67 = vector.load %arg5[%c0_21, %c1_22, %c0_23] : memref<2x8x2xf32, #tpu.memory_space<vmem>>, vector<2x1x2xf32>
    %68 = vector.shape_cast %67 : vector<2x1x2xf32> to vector<2x2xf32>
    %69 = vector.shape_cast %66 : vector<2x2xf32> to vector<2x1x2xf32>
    tpu.vector_store %arg5[%c0_21, %c1_22, %c0_23], %69 {strides = array<i32>} : memref<2x8x2xf32, #tpu.memory_space<vmem>>, vector<2x1x2xf32>,
    %c0_24 = arith.constant 0 : index
    %c2 = arith.constant 2 : index
    %c0_25 = arith.constant 0 : index
    %70 = vector.load %arg1[%c0_24, %c2, %c0_25] : memref<2x8x8xf32, #tpu.memory_space<vmem>>, vector<2x1x8xf32>
    %71 = vector.shape_cast %70 : vector<2x1x8xf32> to vector<2x8xf32>
    %cst_26 = arith.constant dense<0.000000e+00> : vector<2x8xf32>
    %72 = tpu.matmul %66, %3, %cst_26 {dimension_numbers = #tpu.dot_dimension_numbers<[1], [0], [0], [1], [0, 0, 1, 1], [], []>} : vector<2x2xf32>, vector<2x8xf32>, vector<2x8xf32> -> vector<2x8xf32>
    %73 = arith.addf %71, %72 : vector<2x8xf32>
    %74 = vector.extract_strided_slice %73 {offsets = [0, 0], sizes = [2, 2], strides = [1, 1]} : vector<2x8xf32> to vector<2x2xf32>
    %75 = arith.negf %74 : vector<2x2xf32>
    %76 = math.exp %75 : vector<2x2xf32>
    %cst_27 = arith.constant 1.000000e+00 : f32
    %77 = vector.broadcast %cst_27 : f32 to vector<2x2xf32>
    %78 = arith.addf %77, %76 : vector<2x2xf32>
    %79 = arith.divf %77, %78 : vector<2x2xf32>
    %80 = vector.extract_strided_slice %73 {offsets = [0, 2], sizes = [2, 2], strides = [1, 1]} : vector<2x8xf32> to vector<2x2xf32>
    %81 = arith.negf %80 : vector<2x2xf32>
    %82 = math.exp %81 : vector<2x2xf32>
    %cst_28 = arith.constant 1.000000e+00 : f32
    %83 = vector.broadcast %cst_28 : f32 to vector<2x2xf32>
    %84 = arith.addf %83, %82 : vector<2x2xf32>
    %85 = arith.divf %83, %84 : vector<2x2xf32>
    %86 = vector.extract_strided_slice %73 {offsets = [0, 4], sizes = [2, 2], strides = [1, 1]} : vector<2x8xf32> to vector<2x2xf32>
    %87 = math.tanh %86 : vector<2x2xf32>
    %88 = vector.extract_strided_slice %73 {offsets = [0, 6], sizes = [2, 2], strides = [1, 1]} : vector<2x8xf32> to vector<2x2xf32>
    %89 = arith.negf %88 : vector<2x2xf32>
    %90 = math.exp %89 : vector<2x2xf32>
    %cst_29 = arith.constant 1.000000e+00 : f32
    %91 = vector.broadcast %cst_29 : f32 to vector<2x2xf32>
    %92 = arith.addf %91, %90 : vector<2x2xf32>
    %93 = arith.divf %91, %92 : vector<2x2xf32>
    %94 = arith.mulf %85, %64 : vector<2x2xf32>
    %95 = arith.mulf %79, %87 : vector<2x2xf32>
    %96 = arith.addf %94, %95 : vector<2x2xf32>
    %97 = math.tanh %96 : vector<2x2xf32>
    %98 = arith.mulf %93, %97 : vector<2x2xf32>
    %c0_30 = arith.constant 0 : index
    %c2_31 = arith.constant 2 : index
    %c0_32 = arith.constant 0 : index
    %99 = vector.load %arg5[%c0_30, %c2_31, %c0_32] : memref<2x8x2xf32, #tpu.memory_space<vmem>>, vector<2x1x2xf32>
    %100 = vector.shape_cast %99 : vector<2x1x2xf32> to vector<2x2xf32>
    %101 = vector.shape_cast %98 : vector<2x2xf32> to vector<2x1x2xf32>
    tpu.vector_store %arg5[%c0_30, %c2_31, %c0_32], %101 {strides = array<i32>} : memref<2x8x2xf32, #tpu.memory_space<vmem>>, vector<2x1x2xf32>,
    %c0_33 = arith.constant 0 : index
    %c3 = arith.constant 3 : index
    %c0_34 = arith.constant 0 : index
    %102 = vector.load %arg1[%c0_33, %c3, %c0_34] : memref<2x8x8xf32, #tpu.memory_space<vmem>>, vector<2x1x8xf32>
    %103 = vector.shape_cast %102 : vector<2x1x8xf32> to vector<2x8xf32>
    %cst_35 = arith.constant dense<0.000000e+00> : vector<2x8xf32>
    %104 = tpu.matmul %98, %3, %cst_35 {dimension_numbers = #tpu.dot_dimension_numbers<[1], [0], [0], [1], [0, 0, 1, 1], [], []>} : vector<2x2xf32>, vector<2x8xf32>, vector<2x8xf32> -> vector<2x8xf32>
    %105 = arith.addf %103, %104 : vector<2x8xf32>
    %106 = vector.extract_strided_slice %105 {offsets = [0, 0], sizes = [2, 2], strides = [1, 1]} : vector<2x8xf32> to vector<2x2xf32>
    %107 = arith.negf %106 : vector<2x2xf32>
    %108 = math.exp %107 : vector<2x2xf32>
    %cst_36 = arith.constant 1.000000e+00 : f32
    %109 = vector.broadcast %cst_36 : f32 to vector<2x2xf32>
    %110 = arith.addf %109, %108 : vector<2x2xf32>
    %111 = arith.divf %109, %110 : vector<2x2xf32>
    %112 = vector.extract_strided_slice %105 {offsets = [0, 2], sizes = [2, 2], strides = [1, 1]} : vector<2x8xf32> to vector<2x2xf32>
    %113 = arith.negf %112 : vector<2x2xf32>
    %114 = math.exp %113 : vector<2x2xf32>
    %cst_37 = arith.constant 1.000000e+00 : f32
    %115 = vector.broadcast %cst_37 : f32 to vector<2x2xf32>
    %116 = arith.addf %115, %114 : vector<2x2xf32>
    %117 = arith.divf %115, %116 : vector<2x2xf32>
    %118 = vector.extract_strided_slice %105 {offsets = [0, 4], sizes = [2, 2], strides = [1, 1]} : vector<2x8xf32> to vector<2x2xf32>
    %119 = math.tanh %118 : vector<2x2xf32>
    %120 = vector.extract_strided_slice %105 {offsets = [0, 6], sizes = [2, 2], strides = [1, 1]} : vector<2x8xf32> to vector<2x2xf32>
    %121 = arith.negf %120 : vector<2x2xf32>
    %122 = math.exp %121 : vector<2x2xf32>
    %cst_38 = arith.constant 1.000000e+00 : f32
    %123 = vector.broadcast %cst_38 : f32 to vector<2x2xf32>
    %124 = arith.addf %123, %122 : vector<2x2xf32>
    %125 = arith.divf %123, %124 : vector<2x2xf32>
    %126 = arith.mulf %117, %96 : vector<2x2xf32>
    %127 = arith.mulf %111, %119 : vector<2x2xf32>
    %128 = arith.addf %126, %127 : vector<2x2xf32>
    %129 = math.tanh %128 : vector<2x2xf32>
    %130 = arith.mulf %125, %129 : vector<2x2xf32>
    %c0_39 = arith.constant 0 : index
    %c3_40 = arith.constant 3 : index
    %c0_41 = arith.constant 0 : index
    %131 = vector.load %arg5[%c0_39, %c3_40, %c0_41] : memref<2x8x2xf32, #tpu.memory_space<vmem>>, vector<2x1x2xf32>
    %132 = vector.shape_cast %131 : vector<2x1x2xf32> to vector<2x2xf32>
    %133 = vector.shape_cast %130 : vector<2x2xf32> to vector<2x1x2xf32>
    tpu.vector_store %arg5[%c0_39, %c3_40, %c0_41], %133 {strides = array<i32>} : memref<2x8x2xf32, #tpu.memory_space<vmem>>, vector<2x1x2xf32>,
    %c0_42 = arith.constant 0 : index
    %c4 = arith.constant 4 : index
    %c0_43 = arith.constant 0 : index
    %134 = vector.load %arg1[%c0_42, %c4, %c0_43] : memref<2x8x8xf32, #tpu.memory_space<vmem>>, vector<2x1x8xf32>
    %135 = vector.shape_cast %134 : vector<2x1x8xf32> to vector<2x8xf32>
    %cst_44 = arith.constant dense<0.000000e+00> : vector<2x8xf32>
    %136 = tpu.matmul %130, %3, %cst_44 {dimension_numbers = #tpu.dot_dimension_numbers<[1], [0], [0], [1], [0, 0, 1, 1], [], []>} : vector<2x2xf32>, vector<2x8xf32>, vector<2x8xf32> -> vector<2x8xf32>
    %137 = arith.addf %135, %136 : vector<2x8xf32>
    %138 = vector.extract_strided_slice %137 {offsets = [0, 0], sizes = [2, 2], strides = [1, 1]} : vector<2x8xf32> to vector<2x2xf32>
    %139 = arith.negf %138 : vector<2x2xf32>
    %140 = math.exp %139 : vector<2x2xf32>
    %cst_45 = arith.constant 1.000000e+00 : f32
    %141 = vector.broadcast %cst_45 : f32 to vector<2x2xf32>
    %142 = arith.addf %141, %140 : vector<2x2xf32>
    %143 = arith.divf %141, %142 : vector<2x2xf32>
    %144 = vector.extract_strided_slice %137 {offsets = [0, 2], sizes = [2, 2], strides = [1, 1]} : vector<2x8xf32> to vector<2x2xf32>
    %145 = arith.negf %144 : vector<2x2xf32>
    %146 = math.exp %145 : vector<2x2xf32>
    %cst_46 = arith.constant 1.000000e+00 : f32
    %147 = vector.broadcast %cst_46 : f32 to vector<2x2xf32>
    %148 = arith.addf %147, %146 : vector<2x2xf32>
    %149 = arith.divf %147, %148 : vector<2x2xf32>
    %150 = vector.extract_strided_slice %137 {offsets = [0, 4], sizes = [2, 2], strides = [1, 1]} : vector<2x8xf32> to vector<2x2xf32>
    %151 = math.tanh %150 : vector<2x2xf32>
    %152 = vector.extract_strided_slice %137 {offsets = [0, 6], sizes = [2, 2], strides = [1, 1]} : vector<2x8xf32> to vector<2x2xf32>
    %153 = arith.negf %152 : vector<2x2xf32>
    %154 = math.exp %153 : vector<2x2xf32>
    %cst_47 = arith.constant 1.000000e+00 : f32
    %155 = vector.broadcast %cst_47 : f32 to vector<2x2xf32>
    %156 = arith.addf %155, %154 : vector<2x2xf32>
    %157 = arith.divf %155, %156 : vector<2x2xf32>
    %158 = arith.mulf %149, %128 : vector<2x2xf32>
    %159 = arith.mulf %143, %151 : vector<2x2xf32>
    %160 = arith.addf %158, %159 : vector<2x2xf32>
    %161 = math.tanh %160 : vector<2x2xf32>
    %162 = arith.mulf %157, %161 : vector<2x2xf32>
    %c0_48 = arith.constant 0 : index
    %c4_49 = arith.constant 4 : index
    %c0_50 = arith.constant 0 : index
    %163 = vector.load %arg5[%c0_48, %c4_49, %c0_50] : memref<2x8x2xf32, #tpu.memory_space<vmem>>, vector<2x1x2xf32>
    %164 = vector.shape_cast %163 : vector<2x1x2xf32> to vector<2x2xf32>
    %165 = vector.shape_cast %162 : vector<2x2xf32> to vector<2x1x2xf32>
    tpu.vector_store %arg5[%c0_48, %c4_49, %c0_50], %165 {strides = array<i32>} : memref<2x8x2xf32, #tpu.memory_space<vmem>>, vector<2x1x2xf32>,
    %c0_51 = arith.constant 0 : index
    %c5 = arith.constant 5 : index
    %c0_52 = arith.constant 0 : index
    %166 = vector.load %arg1[%c0_51, %c5, %c0_52] : memref<2x8x8xf32, #tpu.memory_space<vmem>>, vector<2x1x8xf32>
    %167 = vector.shape_cast %166 : vector<2x1x8xf32> to vector<2x8xf32>
    %cst_53 = arith.constant dense<0.000000e+00> : vector<2x8xf32>
    %168 = tpu.matmul %162, %3, %cst_53 {dimension_numbers = #tpu.dot_dimension_numbers<[1], [0], [0], [1], [0, 0, 1, 1], [], []>} : vector<2x2xf32>, vector<2x8xf32>, vector<2x8xf32> -> vector<2x8xf32>
    %169 = arith.addf %167, %168 : vector<2x8xf32>
    %170 = vector.extract_strided_slice %169 {offsets = [0, 0], sizes = [2, 2], strides = [1, 1]} : vector<2x8xf32> to vector<2x2xf32>
    %171 = arith.negf %170 : vector<2x2xf32>
    %172 = math.exp %171 : vector<2x2xf32>
    %cst_54 = arith.constant 1.000000e+00 : f32
    %173 = vector.broadcast %cst_54 : f32 to vector<2x2xf32>
    %174 = arith.addf %173, %172 : vector<2x2xf32>
    %175 = arith.divf %173, %174 : vector<2x2xf32>
    %176 = vector.extract_strided_slice %169 {offsets = [0, 2], sizes = [2, 2], strides = [1, 1]} : vector<2x8xf32> to vector<2x2xf32>
    %177 = arith.negf %176 : vector<2x2xf32>
    %178 = math.exp %177 : vector<2x2xf32>
    %cst_55 = arith.constant 1.000000e+00 : f32
    %179 = vector.broadcast %cst_55 : f32 to vector<2x2xf32>
    %180 = arith.addf %179, %178 : vector<2x2xf32>
    %181 = arith.divf %179, %180 : vector<2x2xf32>
    %182 = vector.extract_strided_slice %169 {offsets = [0, 4], sizes = [2, 2], strides = [1, 1]} : vector<2x8xf32> to vector<2x2xf32>
    %183 = math.tanh %182 : vector<2x2xf32>
    %184 = vector.extract_strided_slice %169 {offsets = [0, 6], sizes = [2, 2], strides = [1, 1]} : vector<2x8xf32> to vector<2x2xf32>
    %185 = arith.negf %184 : vector<2x2xf32>
    %186 = math.exp %185 : vector<2x2xf32>
    %cst_56 = arith.constant 1.000000e+00 : f32
    %187 = vector.broadcast %cst_56 : f32 to vector<2x2xf32>
    %188 = arith.addf %187, %186 : vector<2x2xf32>
    %189 = arith.divf %187, %188 : vector<2x2xf32>
    %190 = arith.mulf %181, %160 : vector<2x2xf32>
    %191 = arith.mulf %175, %183 : vector<2x2xf32>
    %192 = arith.addf %190, %191 : vector<2x2xf32>
    %193 = math.tanh %192 : vector<2x2xf32>
    %194 = arith.mulf %189, %193 : vector<2x2xf32>
    %c0_57 = arith.constant 0 : index
    %c5_58 = arith.constant 5 : index
    %c0_59 = arith.constant 0 : index
    %195 = vector.load %arg5[%c0_57, %c5_58, %c0_59] : memref<2x8x2xf32, #tpu.memory_space<vmem>>, vector<2x1x2xf32>
    %196 = vector.shape_cast %195 : vector<2x1x2xf32> to vector<2x2xf32>
    %197 = vector.shape_cast %194 : vector<2x2xf32> to vector<2x1x2xf32>
    tpu.vector_store %arg5[%c0_57, %c5_58, %c0_59], %197 {strides = array<i32>} : memref<2x8x2xf32, #tpu.memory_space<vmem>>, vector<2x1x2xf32>,
    %c0_60 = arith.constant 0 : index
    %c6 = arith.constant 6 : index
    %c0_61 = arith.constant 0 : index
    %198 = vector.load %arg1[%c0_60, %c6, %c0_61] : memref<2x8x8xf32, #tpu.memory_space<vmem>>, vector<2x1x8xf32>
    %199 = vector.shape_cast %198 : vector<2x1x8xf32> to vector<2x8xf32>
    %cst_62 = arith.constant dense<0.000000e+00> : vector<2x8xf32>
    %200 = tpu.matmul %194, %3, %cst_62 {dimension_numbers = #tpu.dot_dimension_numbers<[1], [0], [0], [1], [0, 0, 1, 1], [], []>} : vector<2x2xf32>, vector<2x8xf32>, vector<2x8xf32> -> vector<2x8xf32>
    %201 = arith.addf %199, %200 : vector<2x8xf32>
    %202 = vector.extract_strided_slice %201 {offsets = [0, 0], sizes = [2, 2], strides = [1, 1]} : vector<2x8xf32> to vector<2x2xf32>
    %203 = arith.negf %202 : vector<2x2xf32>
    %204 = math.exp %203 : vector<2x2xf32>
    %cst_63 = arith.constant 1.000000e+00 : f32
    %205 = vector.broadcast %cst_63 : f32 to vector<2x2xf32>
    %206 = arith.addf %205, %204 : vector<2x2xf32>
    %207 = arith.divf %205, %206 : vector<2x2xf32>
    %208 = vector.extract_strided_slice %201 {offsets = [0, 2], sizes = [2, 2], strides = [1, 1]} : vector<2x8xf32> to vector<2x2xf32>
    %209 = arith.negf %208 : vector<2x2xf32>
    %210 = math.exp %209 : vector<2x2xf32>
    %cst_64 = arith.constant 1.000000e+00 : f32
    %211 = vector.broadcast %cst_64 : f32 to vector<2x2xf32>
    %212 = arith.addf %211, %210 : vector<2x2xf32>
    %213 = arith.divf %211, %212 : vector<2x2xf32>
    %214 = vector.extract_strided_slice %201 {offsets = [0, 4], sizes = [2, 2], strides = [1, 1]} : vector<2x8xf32> to vector<2x2xf32>
    %215 = math.tanh %214 : vector<2x2xf32>
    %216 = vector.extract_strided_slice %201 {offsets = [0, 6], sizes = [2, 2], strides = [1, 1]} : vector<2x8xf32> to vector<2x2xf32>
    %217 = arith.negf %216 : vector<2x2xf32>
    %218 = math.exp %217 : vector<2x2xf32>
    %cst_65 = arith.constant 1.000000e+00 : f32
    %219 = vector.broadcast %cst_65 : f32 to vector<2x2xf32>
    %220 = arith.addf %219, %218 : vector<2x2xf32>
    %221 = arith.divf %219, %220 : vector<2x2xf32>
    %222 = arith.mulf %213, %192 : vector<2x2xf32>
    %223 = arith.mulf %207, %215 : vector<2x2xf32>
    %224 = arith.addf %222, %223 : vector<2x2xf32>
    %225 = math.tanh %224 : vector<2x2xf32>
    %226 = arith.mulf %221, %225 : vector<2x2xf32>
    %c0_66 = arith.constant 0 : index
    %c6_67 = arith.constant 6 : index
    %c0_68 = arith.constant 0 : index
    %227 = vector.load %arg5[%c0_66, %c6_67, %c0_68] : memref<2x8x2xf32, #tpu.memory_space<vmem>>, vector<2x1x2xf32>
    %228 = vector.shape_cast %227 : vector<2x1x2xf32> to vector<2x2xf32>
    %229 = vector.shape_cast %226 : vector<2x2xf32> to vector<2x1x2xf32>
    tpu.vector_store %arg5[%c0_66, %c6_67, %c0_68], %229 {strides = array<i32>} : memref<2x8x2xf32, #tpu.memory_space<vmem>>, vector<2x1x2xf32>,
    %c0_69 = arith.constant 0 : index
    %c7 = arith.constant 7 : index
    %c0_70 = arith.constant 0 : index
    %230 = vector.load %arg1[%c0_69, %c7, %c0_70] : memref<2x8x8xf32, #tpu.memory_space<vmem>>, vector<2x1x8xf32>
    %231 = vector.shape_cast %230 : vector<2x1x8xf32> to vector<2x8xf32>
    %cst_71 = arith.constant dense<0.000000e+00> : vector<2x8xf32>
    %232 = tpu.matmul %226, %3, %cst_71 {dimension_numbers = #tpu.dot_dimension_numbers<[1], [0], [0], [1], [0, 0, 1, 1], [], []>} : vector<2x2xf32>, vector<2x8xf32>, vector<2x8xf32> -> vector<2x8xf32>
    %233 = arith.addf %231, %232 : vector<2x8xf32>
    %234 = vector.extract_strided_slice %233 {offsets = [0, 0], sizes = [2, 2], strides = [1, 1]} : vector<2x8xf32> to vector<2x2xf32>
    %235 = arith.negf %234 : vector<2x2xf32>
    %236 = math.exp %235 : vector<2x2xf32>
    %cst_72 = arith.constant 1.000000e+00 : f32
    %237 = vector.broadcast %cst_72 : f32 to vector<2x2xf32>
    %238 = arith.addf %237, %236 : vector<2x2xf32>
    %239 = arith.divf %237, %238 : vector<2x2xf32>
    %240 = vector.extract_strided_slice %233 {offsets = [0, 2], sizes = [2, 2], strides = [1, 1]} : vector<2x8xf32> to vector<2x2xf32>
    %241 = arith.negf %240 : vector<2x2xf32>
    %242 = math.exp %241 : vector<2x2xf32>
    %cst_73 = arith.constant 1.000000e+00 : f32
    %243 = vector.broadcast %cst_73 : f32 to vector<2x2xf32>
    %244 = arith.addf %243, %242 : vector<2x2xf32>
    %245 = arith.divf %243, %244 : vector<2x2xf32>
    %246 = vector.extract_strided_slice %233 {offsets = [0, 4], sizes = [2, 2], strides = [1, 1]} : vector<2x8xf32> to vector<2x2xf32>
    %247 = math.tanh %246 : vector<2x2xf32>
    %248 = vector.extract_strided_slice %233 {offsets = [0, 6], sizes = [2, 2], strides = [1, 1]} : vector<2x8xf32> to vector<2x2xf32>
    %249 = arith.negf %248 : vector<2x2xf32>
    %250 = math.exp %249 : vector<2x2xf32>
    %cst_74 = arith.constant 1.000000e+00 : f32
    %251 = vector.broadcast %cst_74 : f32 to vector<2x2xf32>
    %252 = arith.addf %251, %250 : vector<2x2xf32>
    %253 = arith.divf %251, %252 : vector<2x2xf32>
    %254 = arith.mulf %245, %224 : vector<2x2xf32>
    %255 = arith.mulf %239, %247 : vector<2x2xf32>
    %256 = arith.addf %254, %255 : vector<2x2xf32>
    %257 = math.tanh %256 : vector<2x2xf32>
    %258 = arith.mulf %253, %257 : vector<2x2xf32>
    %c0_75 = arith.constant 0 : index
    %c7_76 = arith.constant 7 : index
    %c0_77 = arith.constant 0 : index
    %259 = vector.load %arg5[%c0_75, %c7_76, %c0_77] : memref<2x8x2xf32, #tpu.memory_space<vmem>>, vector<2x1x2xf32>
    %260 = vector.shape_cast %259 : vector<2x1x2xf32> to vector<2x2xf32>
    %261 = vector.shape_cast %258 : vector<2x2xf32> to vector<2x1x2xf32>
    tpu.vector_store %arg5[%c0_75, %c7_76, %c0_77], %261 {strides = array<i32>} : memref<2x8x2xf32, #tpu.memory_space<vmem>>, vector<2x1x2xf32>,
    %c0_78 = arith.constant 0 : index
    %c0_79 = arith.constant 0 : index
    %262 = vector.load %arg7[%c0_78, %c0_79] : memref<2x2xf32, #tpu.memory_space<vmem>>, vector<2x2xf32>
    tpu.vector_store %arg7[%c0_78, %c0_79], %258 {strides = array<i32>} : memref<2x2xf32, #tpu.memory_space<vmem>>, vector<2x2xf32>,
    %c0_80 = arith.constant 0 : index
    %c0_81 = arith.constant 0 : index
    %263 = vector.load %arg8[%c0_80, %c0_81] : memref<2x2xf32, #tpu.memory_space<vmem>>, vector<2x2xf32>
    tpu.vector_store %arg8[%c0_80, %c0_81], %256 {strides = array<i32>} : memref<2x2xf32, #tpu.memory_space<vmem>>, vector<2x2xf32>,
    %c0_i32_82 = arith.constant 0 : i32
    %264 = arith.cmpi eq, %arg0, %c0_i32_82 : i32
    %265 = arith.extui %264 : i1 to i32
    %c0_i32_83 = arith.constant 0 : i32
    %266 = arith.cmpi ne, %265, %c0_i32_83 : i32
    scf.if %266 {
      %c0_84 = arith.constant 0 : index
      %c0_85 = arith.constant 0 : index
      %267 = vector.load %arg3[%c0_84, %c0_85] : memref<2x1xf32, #tpu.memory_space<vmem>>, vector<2x1xf32>
      %cst_86 = arith.constant dense<0.000000e+00> : vector<2x1xf32>
      %268 = tpu.matmul %258, %267, %cst_86 {dimension_numbers = #tpu.dot_dimension_numbers<[1], [0], [0], [1], [0, 0, 1, 1], [], []>} : vector<2x2xf32>, vector<2x1xf32>, vector<2x1xf32> -> vector<2x1xf32>
      %c0_87 = arith.constant 0 : index
      %c0_88 = arith.constant 0 : index
      %269 = vector.load %arg4[%c0_87, %c0_88] : memref<1x1xf32, #tpu.memory_space<vmem>>, vector<1x1xf32>
      %270 = vector.broadcast %269 : vector<1x1xf32> to vector<2x1xf32>
      %271 = arith.addf %268, %270 : vector<2x1xf32>
      %c0_89 = arith.constant 0 : index
      %c0_90 = arith.constant 0 : index
      %272 = vector.load %arg6[%c0_89, %c0_90] : memref<2x1xf32, #tpu.memory_space<vmem>>, vector<2x1xf32>
      tpu.vector_store %arg6[%c0_89, %c0_90], %271 {strides = array<i32>} : memref<2x1xf32, #tpu.memory_space<vmem>>, vector<2x1xf32>,
    } else {
    }
    return
  }
  func.func @transform_0(%arg0: i32) -> (i32, i32, i32) {
    %c0_i32 = arith.constant 0 : i32
    %c0_i32_0 = arith.constant 0 : i32
    %c0_i32_1 = arith.constant 0 : i32
    return %c0_i32, %arg0, %c0_i32_0 : i32, i32, i32
  }
  func.func @transform_1(%arg0: i32) -> (i32, i32) {
    %c0_i32 = arith.constant 0 : i32
    %c0_i32_0 = arith.constant 0 : i32
    %c0_i32_1 = arith.constant 0 : i32
    return %c0_i32, %c0_i32_0 : i32, i32
  }
  func.func @transform_2(%arg0: i32) -> (i32, i32) {
    %c0_i32 = arith.constant 0 : i32
    %c0_i32_0 = arith.constant 0 : i32
    %c0_i32_1 = arith.constant 0 : i32
    return %c0_i32, %c0_i32_0 : i32, i32
  }
  func.func @transform_3(%arg0: i32) -> (i32, i32) {
    %c0_i32 = arith.constant 0 : i32
    %c0_i32_0 = arith.constant 0 : i32
    %c0_i32_1 = arith.constant 0 : i32
    return %c0_i32, %c0_i32_0 : i32, i32
  }
  func.func @transform_4(%arg0: i32) -> (i32, i32, i32) {
    %c0_i32 = arith.constant 0 : i32
    %c0_i32_0 = arith.constant 0 : i32
    %c0_i32_1 = arith.constant 0 : i32
    return %c0_i32, %arg0, %c0_i32_0 : i32, i32, i32
  }
  func.func @transform_5(%arg0: i32) -> (i32, i32) {
    %c0_i32 = arith.constant 0 : i32
    %c0_i32_0 = arith.constant 0 : i32
    %c0_i32_1 = arith.constant 0 : i32
    return %c0_i32, %c0_i32_0 : i32, i32
  }
}

</mosaic_0001>

<llo_original>
// kernel: lstm_forward.1
$region0: #{lstm_forward.1}
  #allocation0 [shape = 'u32[]', space=smem, size = 0x4, offset = 0x4, fixed_abs, tag = 'smem constant byte address 0x4 - core index']
  #allocation1 [shape = 'u32[144,128]{1,0:T(1,128)}', space=vmem, size = 0x12000, scoped, tag = 'internal scratch']
  #allocation2 [shape = 'f32[2,2]{1,0:T(2,128)}', space=vmem, size = 0x400, scoped, tag = 'scratch operand']
  #allocation3 [shape = 'f32[2,2]{1,0:T(2,128)}', space=vmem, size = 0x400, scoped, tag = 'scratch operand']
  #allocation4 [shape = 'f32[1,1]{1,0:T(1,128)S(1)}', space=vmem, size = 0x200, scoped, tag = 'scoped memory for lstm_forward.1']
  %s0 = inlined_call_operand.vmem [shape: f32[2,8,8], index: 0, kind: input, shape index: {}]
  %s1 = inlined_call_operand.vmem [shape: f32[2,8], index: 1, kind: input, shape index: {}]
  %s2 = inlined_call_operand.vmem [shape: f32[2,1], index: 2, kind: input, shape index: {}]
  %s3 = inlined_call_operand.<no memory space> [shape: f32[1,1], index: 3, kind: input, shape index: {}]
  %s4 = inlined_call_operand.vmem [shape: f32[2,8,2], index: 4, kind: output, shape index: {0}]
  %s5 = inlined_call_operand.vmem [shape: f32[2,1], index: 5, kind: output, shape index: {1}]
  %6 = xla_tuple %s4, %s5
  %s7 = sld [smem:[#allocation0]]
  $region42: #{lstm_forward.1} parent=0
    _
  %s9 = ssub.s32 1, %s7
  %s10 = scalar_select 0, %s9, %s7
  %v11 = vstv %s3
  %12 = vst [vmem:[#allocation4] sm:$0x1] %v11
  // Predicated region
  $region2: #{lstm_forward.1} parent=0 // pred_check
    _
  $region3: #{lstm_forward.1} parent=0 // pred_check_branch
    %14 = sbr.rel (0) target = $region5
  $region4: #{lstm_forward.1} parent=0 // pred_region
    _
  $region5: #{lstm_forward.1} parent=0 // pred_fallthru
    _
  // Predicated region
  $region6: #{lstm_forward.1} parent=0 // pred_check
    _
  $region7: #{lstm_forward.1} parent=0 // pred_check_branch
    %16 = sbr.rel (0) target = $region9
  $region8: #{lstm_forward.1} parent=0 // pred_region
    _
  $region9: #{lstm_forward.1} parent=0 // pred_fallthru
    _
  // Predicated region
  $region10: #{lstm_forward.1} parent=0 // pred_check
    _
  $region11: #{lstm_forward.1} parent=0 // pred_check_branch
    %18 = sbr.rel (0) target = $region13
  $region12: #{lstm_forward.1} parent=0 // pred_region
    _
  $region13: #{lstm_forward.1} parent=0 // pred_fallthru
    _
  // Predicated region
  $region14: #{lstm_forward.1} parent=0 // pred_check
    _
  $region15: #{lstm_forward.1} parent=0 // pred_check_branch
    %20 = sbr.rel (0) target = $region17
  $region16: #{lstm_forward.1} parent=0 // pred_region
    _
  $region17: #{lstm_forward.1} parent=0 // pred_fallthru
    _
  %p21 = scmp.eq.s32.totalorder 0, 0
  // Predicated region
  $region18: #{lstm_forward.1} parent=0 // pred_check
    %p22 = pneg %p21
  $region19: #{lstm_forward.1} parent=0 // pred_check_branch
    %24 = sbr.rel (%p22) target = $region21
  $region20: #{lstm_forward.1} parent=0 // pred_region
    %vm25 = vcmask 9216
    %26 = vst.msk [vmem:[#allocation2] sm:$0x3] %vm25, 0.0
    %27 = vst.msk [vmem:[#allocation3] sm:$0x3] %vm25, 0.0
    %vm28 = vcmask 1024
    %29 = vst.msk [vmem:[%s5] sm:$0x3] %vm28, 0.0
  $region21: #{lstm_forward.1} parent=0 // pred_fallthru
    _
  %v30 = vld [vmem:[%s1] sm:$0x3]
  %v31 = vld [vmem:[#allocation2] sm:$0x3]
  %v32 = vld [vmem:[#allocation3] sm:$0x3]
  %v33 = vld [vmem:[%s0] sm:$0x1]
  %v34 = vld [vmem:[%s0 + $0x8] sm:$0x1]
  %vm35 = vcmask 15360
  %v37 = vsel %vm35, %v31, 0
  %vm39 = vcmask 1041408
  %v41 = vsel %vm39, %v30, 0
  %43 = vmatprep.subr.mxu0 0.0
  %44 = vmatpush1.msra.mxu0 %v41
  %45 = vmatprep.subr.mxu0 0.0
  %46 = vmatpush1.msra.mxu0 0.0
  %47 = vmatprep.subr.mxu0 0.0
  %48 = vmatpush1.msra.mxu0 0.0
  %49 = vmatprep.subr.mxu0 0.0
  %50 = vmatpush1.msra.mxu0 0.0
  %51 = vmatprep.subr.mxu0 0.0
  %52 = vmatpush1.msra.mxu0 0.0
  %53 = vmatprep.subr.mxu0 0.0
  %54 = vmatpush1.msra.mxu0 0.0
  %55 = vmatprep.subr.mxu0 0.0
  %56 = vmatpush1.msra.mxu0 0.0
  %57 = vmatprep.subr.mxu0 0.0
  %58 = vmatpush1.msra.mxu0 0.0
  %59 = vmatprep.subr.mxu0 0.0
  %60 = vmatpush1.msra.mxu0 0.0
  %61 = vmatprep.subr.mxu0 0.0
  %62 = vmatpush1.msra.mxu0 0.0
  %63 = vmatprep.subr.mxu0 0.0
  %64 = vmatpush1.msra.mxu0 0.0
  %65 = vmatprep.subr.mxu0 0.0
  %66 = vmatpush1.msra.mxu0 0.0
  %67 = vmatprep.subr.mxu0 0.0
  %68 = vmatpush1.msra.mxu0 0.0
  %69 = vmatprep.subr.mxu0 0.0
  %70 = vmatpush1.msra.mxu0 0.0
  %71 = vmatprep.subr.mxu0 0.0
  %72 = vmatpush1.msra.mxu0 0.0
  %73 = vmatprep.subr.mxu0 0.0
  %74 = vmatpush1.msra.mxu0 0.0
  %75 = vmatprep.subr.mxu0 0.0
  %76 = vmatpush1.msra.mxu0 0.0
  %77 = vmatprep.subr.mxu0 0.0
  %78 = vmatpush1.msra.mxu0 0.0
  %79 = vmatprep.subr.mxu0 0.0
  %80 = vmatpush1.msra.mxu0 0.0
  %81 = vmatprep.subr.mxu0 0.0
  %82 = vmatpush1.msra.mxu0 0.0
  %83 = vmatprep.subr.mxu0 0.0
  %84 = vmatpush1.msra.mxu0 0.0
  %85 = vmatprep.subr.mxu0 0.0
  %86 = vmatpush1.msra.mxu0 0.0
  %87 = vmatprep.subr.mxu0 0.0
  %88 = vmatpush1.msra.mxu0 0.0
  %89 = vmatprep.subr.mxu0 0.0
  %90 = vmatpush1.msra.mxu0 0.0
  %91 = vmatprep.subr.mxu0 0.0
  %92 = vmatpush1.msra.mxu0 0.0
  %93 = vmatprep.subr.mxu0 0.0
  %94 = vmatpush1.msra.mxu0 0.0
  %95 = vmatprep.subr.mxu0 0.0
  %96 = vmatpush1.msra.mxu0 0.0
  %97 = vmatprep.subr.mxu0 0.0
  %98 = vmatpush1.msra.mxu0 0.0
  %99 = vmatprep.subr.mxu0 0.0
  %100 = vmatpush1.msra.mxu0 0.0
  %101 = vmatprep.subr.mxu0 0.0
  %102 = vmatpush1.msra.mxu0 0.0
  %103 = vmatprep.subr.mxu0 0.0
  %104 = vmatpush1.msra.mxu0 0.0
  %105 = vmatprep.subr.mxu0 0.0
  %106 = vmatpush1.msra.mxu0 0.0
  %107 = vmatprep.mubr.f32.mxu0 0.0
  %108 = vmatmul.mubr.f32.gmra.mrb[0].mxu0 %v37
  %v109 = vpop.f32.mrb[0].mxu0
  %v110 = vadd.f32 0.0, %v109
  %v111 = vpop.f32.mrb[0].mxu0
  %112 = vdwg.mxu0
  %v114 = vrot.slane %v110, 1
  %v117 = vadd.f32 %v33, %v110
  %v118 = vadd.f32 %v34, %v114
  %v119 = vxor.u32 %v117, 2147483648
  %v120 = vxor.u32 %v118, 2147483648
  %v121 = vmul.f32 %v119, 1.442695
  %v122 = vpow.pop %v121
  %v123 = vmul.f32 %v120, 1.442695
  %v124 = vpow.pop %v123
  %v125 = vadd.f32 %v122, 1.0
  %v126 = vadd.f32 %v124, 1.0
  %v127 = vrcp.pop %v125
  %v128 = vmul.f32 1.0, %v127
  %v129 = vrcp.pop %v126
  %v130 = vmul.f32 1.0, %v129
  %v131 = vtanh.pop %v117
  %v132 = vtanh.pop %v118
  %v134 = vrot.slane %v32, 1
  %135 = vrot.lane.b32.xlu0 %v32, 2
  %v136 = vpop.permute.xlu0 %135
  %137 = vrot.lane.b32.xlu0 %v134, 2
  %v138 = vpop.permute.xlu0 %137
  %v141 = vmul.f32 %v128, %v136
  %v142 = vmul.f32 %v130, %v138
  %145 = vrot.lane.b32.xlu0 %v131, 124
  %v146 = vpop.permute.xlu0 %145
  %147 = vrot.lane.b32.xlu0 %v132, 124
  %v148 = vpop.permute.xlu0 %147
  %v151 = vmul.f32 %v128, %v146
  %v152 = vmul.f32 %v130, %v148
  %155 = vrot.lane.b32.xlu0 %v151, 2
  %v156 = vpop.permute.xlu0 %155
  %157 = vrot.lane.b32.xlu0 %v152, 2
  %v158 = vpop.permute.xlu0 %157
  %v161 = vadd.f32 %v141, %v156
  %v162 = vadd.f32 %v142, %v158
  %v163 = vtanh.pop %v161
  %v164 = vtanh.pop %v162
  %167 = vrot.lane.b32.xlu0 %v163, 4
  %v168 = vpop.permute.xlu0 %167
  %169 = vrot.lane.b32.xlu0 %v164, 4
  %v170 = vpop.permute.xlu0 %169
  %v173 = vmul.f32 %v128, %v168
  %v174 = vmul.f32 %v130, %v170
  %177 = vrot.lane.b32.xlu0 %v173, 122
  %v178 = vpop.permute.xlu0 %177
  %179 = vrot.lane.b32.xlu0 %v174, 122
  %v180 = vpop.permute.xlu0 %179
  %vm183 = vcmask 8192
  %184 = vst.msk [vmem:[%s4] sm:$0x1] %vm183, %v178
  %185 = vst.msk [vmem:[%s4 + $0x8] sm:$0x1] %vm183, %v180
  %v186 = vld [vmem:[%s0 + $0x1] sm:$0x1]
  %v187 = vld [vmem:[%s0 + $0x9] sm:$0x1]
  %v188 = vrot.slane %v174, 7
  %vm189 = vcmask 1041409
  %v190 = vsel %vm189, %v188, %v173
  %191 = vrot.lane.b32.xlu0 %v190, 122
  %v192 = vpop.permute.xlu0 %191
  %v193 = vsel %vm35, %v192, 0
  %195 = vmatprep.subr.mxu0 0.0
  %196 = vmatpush1.msra.mxu0 %v41
  %197 = vmatprep.subr.mxu0 0.0
  %198 = vmatpush1.msra.mxu0 0.0
  %199 = vmatprep.subr.mxu0 0.0
  %200 = vmatpush1.msra.mxu0 0.0
  %201 = vmatprep.subr.mxu0 0.0
  %202 = vmatpush1.msra.mxu0 0.0
  %203 = vmatprep.subr.mxu0 0.0
  %204 = vmatpush1.msra.mxu0 0.0
  %205 = vmatprep.subr.mxu0 0.0
  %206 = vmatpush1.msra.mxu0 0.0
  %207 = vmatprep.subr.mxu0 0.0
  %208 = vmatpush1.msra.mxu0 0.0
  %209 = vmatprep.subr.mxu0 0.0
  %210 = vmatpush1.msra.mxu0 0.0
  %211 = vmatprep.subr.mxu0 0.0
  %212 = vmatpush1.msra.mxu0 0.0
  %213 = vmatprep.subr.mxu0 0.0
  %214 = vmatpush1.msra.mxu0 0.0
  %215 = vmatprep.subr.mxu0 0.0
  %216 = vmatpush1.msra.mxu0 0.0
  %217 = vmatprep.subr.mxu0 0.0
  %218 = vmatpush1.msra.mxu0 0.0
  %219 = vmatprep.subr.mxu0 0.0
  %220 = vmatpush1.msra.mxu0 0.0
  %221 = vmatprep.subr.mxu0 0.0
  %222 = vmatpush1.msra.mxu0 0.0
  %223 = vmatprep.subr.mxu0 0.0
  %224 = vmatpush1.msra.mxu0 0.0
  %225 = vmatprep.subr.mxu0 0.0
  %226 = vmatpush1.msra.mxu0 0.0
  %227 = vmatprep.subr.mxu0 0.0
  %228 = vmatpush1.msra.mxu0 0.0
  %229 = vmatprep.subr.mxu0 0.0
  %230 = vmatpush1.msra.mxu0 0.0
  %231 = vmatprep.subr.mxu0 0.0
  %232 = vmatpush1.msra.mxu0 0.0
  %233 = vmatprep.subr.mxu0 0.0
  %234 = vmatpush1.msra.mxu0 0.0
  %235 = vmatprep.subr.mxu0 0.0
  %236 = vmatpush1.msra.mxu0 0.0
  %237 = vmatprep.subr.mxu0 0.0
  %238 = vmatpush1.msra.mxu0 0.0
  %239 = vmatprep.subr.mxu0 0.0
  %240 = vmatpush1.msra.mxu0 0.0
  %241 = vmatprep.subr.mxu0 0.0
  %242 = vmatpush1.msra.mxu0 0.0
  %243 = vmatprep.subr.mxu0 0.0
  %244 = vmatpush1.msra.mxu0 0.0
  %245 = vmatprep.subr.mxu0 0.0
  %246 = vmatpush1.msra.mxu0 0.0
  %247 = vmatprep.subr.mxu0 0.0
  %248 = vmatpush1.msra.mxu0 0.0
  %249 = vmatprep.subr.mxu0 0.0
  %250 = vmatpush1.msra.mxu0 0.0
  %251 = vmatprep.subr.mxu0 0.0
  %252 = vmatpush1.msra.mxu0 0.0
  %253 = vmatprep.subr.mxu0 0.0
  %254 = vmatpush1.msra.mxu0 0.0
  %255 = vmatprep.subr.mxu0 0.0
  %256 = vmatpush1.msra.mxu0 0.0
  %257 = vmatprep.subr.mxu0 0.0
  %258 = vmatpush1.msra.mxu0 0.0
  %259 = vmatprep.mubr.f32.mxu0 0.0
  %260 = vmatmul.mubr.f32.gmra.mrb[0].mxu0 %v193
  %v261 = vpop.f32.mrb[0].mxu0
  %v262 = vadd.f32 0.0, %v261
  %v263 = vpop.f32.mrb[0].mxu0
  %264 = vdwg.mxu0
  %v266 = vrot.slane %v262, 1
  %v269 = vadd.f32 %v186, %v262
  %v270 = vadd.f32 %v187, %v266
  %v271 = vxor.u32 %v269, 2147483648
  %v272 = vxor.u32 %v270, 2147483648
  %v273 = vmul.f32 %v271, 1.442695
  %v274 = vpow.pop %v273
  %v275 = vmul.f32 %v272, 1.442695
  %v276 = vpow.pop %v275
  %v277 = vadd.f32 %v274, 1.0
  %v278 = vadd.f32 %v276, 1.0
  %v279 = vrcp.pop %v277
  %v280 = vmul.f32 1.0, %v279
  %v281 = vrcp.pop %v278
  %v282 = vmul.f32 1.0, %v281
  %v283 = vtanh.pop %v269
  %v284 = vtanh.pop %v270
  %v285 = vmul.f32 %v280, %v161
  %v286 = vmul.f32 %v282, %v162
  %289 = vrot.lane.b32.xlu0 %v283, 124
  %v290 = vpop.permute.xlu0 %289
  %291 = vrot.lane.b32.xlu0 %v284, 124
  %v292 = vpop.permute.xlu0 %291
  %v295 = vmul.f32 %v280, %v290
  %v296 = vmul.f32 %v282, %v292
  %299 = vrot.lane.b32.xlu0 %v295, 2
  %v300 = vpop.permute.xlu0 %299
  %301 = vrot.lane.b32.xlu0 %v296, 2
  %v302 = vpop.permute.xlu0 %301
  %v305 = vadd.f32 %v285, %v300
  %v306 = vadd.f32 %v286, %v302
  %v307 = vtanh.pop %v305
  %v308 = vtanh.pop %v306
  %311 = vrot.lane.b32.xlu0 %v307, 4
  %v312 = vpop.permute.xlu0 %311
  %313 = vrot.lane.b32.xlu0 %v308, 4
  %v314 = vpop.permute.xlu0 %313
  %v317 = vmul.f32 %v280, %v312
  %v318 = vmul.f32 %v282, %v314
  %321 = vrot.lane.b32.xlu0 %v317, 122
  %v322 = vpop.permute.xlu0 %321
  %323 = vrot.lane.b32.xlu0 %v318, 122
  %v324 = vpop.permute.xlu0 %323
  %327 = vst.msk [vmem:[%s4 + $0x1] sm:$0x1] %vm183, %v322
  %328 = vst.msk [vmem:[%s4 + $0x9] sm:$0x1] %vm183, %v324
  %v329 = vld [vmem:[%s0 + $0x2] sm:$0x1]
  %v330 = vld [vmem:[%s0 + $0xa] sm:$0x1]
  %v331 = vrot.slane %v318, 7
  %v332 = vsel %vm189, %v331, %v317
  %333 = vrot.lane.b32.xlu0 %v332, 122
  %v334 = vpop.permute.xlu0 %333
  %v335 = vsel %vm35, %v334, 0
  %337 = vmatprep.subr.mxu0 0.0
  %338 = vmatpush1.msra.mxu0 %v41
  %339 = vmatprep.subr.mxu0 0.0
  %340 = vmatpush1.msra.mxu0 0.0
  %341 = vmatprep.subr.mxu0 0.0
  %342 = vmatpush1.msra.mxu0 0.0
  %343 = vmatprep.subr.mxu0 0.0
  %344 = vmatpush1.msra.mxu0 0.0
  %345 = vmatprep.subr.mxu0 0.0
  %346 = vmatpush1.msra.mxu0 0.0
  %347 = vmatprep.subr.mxu0 0.0
  %348 = vmatpush1.msra.mxu0 0.0
  %349 = vmatprep.subr.mxu0 0.0
  %350 = vmatpush1.msra.mxu0 0.0
  %351 = vmatprep.subr.mxu0 0.0
  %352 = vmatpush1.msra.mxu0 0.0
  %353 = vmatprep.subr.mxu0 0.0
  %354 = vmatpush1.msra.mxu0 0.0
  %355 = vmatprep.subr.mxu0 0.0
  %356 = vmatpush1.msra.mxu0 0.0
  %357 = vmatprep.subr.mxu0 0.0
  %358 = vmatpush1.msra.mxu0 0.0
  %359 = vmatprep.subr.mxu0 0.0
  %360 = vmatpush1.msra.mxu0 0.0
  %361 = vmatprep.subr.mxu0 0.0
  %362 = vmatpush1.msra.mxu0 0.0
  %363 = vmatprep.subr.mxu0 0.0
  %364 = vmatpush1.msra.mxu0 0.0
  %365 = vmatprep.subr.mxu0 0.0
  %366 = vmatpush1.msra.mxu0 0.0
  %367 = vmatprep.subr.mxu0 0.0
  %368 = vmatpush1.msra.mxu0 0.0
  %369 = vmatprep.subr.mxu0 0.0
  %370 = vmatpush1.msra.mxu0 0.0
  %371 = vmatprep.subr.mxu0 0.0
  %372 = vmatpush1.msra.mxu0 0.0
  %373 = vmatprep.subr.mxu0 0.0
  %374 = vmatpush1.msra.mxu0 0.0
  %375 = vmatprep.subr.mxu0 0.0
  %376 = vmatpush1.msra.mxu0 0.0
  %377 = vmatprep.subr.mxu0 0.0
  %378 = vmatpush1.msra.mxu0 0.0
  %379 = vmatprep.subr.mxu0 0.0
  %380 = vmatpush1.msra.mxu0 0.0
  %381 = vmatprep.subr.mxu0 0.0
  %382 = vmatpush1.msra.mxu0 0.0
  %383 = vmatprep.subr.mxu0 0.0
  %384 = vmatpush1.msra.mxu0 0.0
  %385 = vmatprep.subr.mxu0 0.0
  %386 = vmatpush1.msra.mxu0 0.0
  %387 = vmatprep.subr.mxu0 0.0
  %388 = vmatpush1.msra.mxu0 0.0
  %389 = vmatprep.subr.mxu0 0.0
  %390 = vmatpush1.msra.mxu0 0.0
  %391 = vmatprep.subr.mxu0 0.0
  %392 = vmatpush1.msra.mxu0 0.0
  %393 = vmatprep.subr.mxu0 0.0
  %394 = vmatpush1.msra.mxu0 0.0
  %395 = vmatprep.subr.mxu0 0.0
  %396 = vmatpush1.msra.mxu0 0.0
  %397 = vmatprep.subr.mxu0 0.0
  %398 = vmatpush1.msra.mxu0 0.0
  %399 = vmatprep.subr.mxu0 0.0
  %400 = vmatpush1.msra.mxu0 0.0
  %401 = vmatprep.mubr.f32.mxu0 0.0
  %402 = vmatmul.mubr.f32.gmra.mrb[0].mxu0 %v335
  %v403 = vpop.f32.mrb[0].mxu0
  %v404 = vadd.f32 0.0, %v403
  %v405 = vpop.f32.mrb[0].mxu0
  %406 = vdwg.mxu0
  %v408 = vrot.slane %v404, 1
  %v411 = vadd.f32 %v329, %v404
  %v412 = vadd.f32 %v330, %v408
  %v413 = vxor.u32 %v411, 2147483648
  %v414 = vxor.u32 %v412, 2147483648
  %v415 = vmul.f32 %v413, 1.442695
  %v416 = vpow.pop %v415
  %v417 = vmul.f32 %v414, 1.442695
  %v418 = vpow.pop %v417
  %v419 = vadd.f32 %v416, 1.0
  %v420 = vadd.f32 %v418, 1.0
  %v421 = vrcp.pop %v419
  %v422 = vmul.f32 1.0, %v421
  %v423 = vrcp.pop %v420
  %v424 = vmul.f32 1.0, %v423
  %v425 = vtanh.pop %v411
  %v426 = vtanh.pop %v412
  %v427 = vmul.f32 %v422, %v305
  %v428 = vmul.f32 %v424, %v306
  %431 = vrot.lane.b32.xlu0 %v425, 124
  %v432 = vpop.permute.xlu0 %431
  %433 = vrot.lane.b32.xlu0 %v426, 124
  %v434 = vpop.permute.xlu0 %433
  %v437 = vmul.f32 %v422, %v432
  %v438 = vmul.f32 %v424, %v434
  %441 = vrot.lane.b32.xlu0 %v437, 2
  %v442 = vpop.permute.xlu0 %441
  %443 = vrot.lane.b32.xlu0 %v438, 2
  %v444 = vpop.permute.xlu0 %443
  %v447 = vadd.f32 %v427, %v442
  %v448 = vadd.f32 %v428, %v444
  %v449 = vtanh.pop %v447
  %v450 = vtanh.pop %v448
  %453 = vrot.lane.b32.xlu0 %v449, 4
  %v454 = vpop.permute.xlu0 %453
  %455 = vrot.lane.b32.xlu0 %v450, 4
  %v456 = vpop.permute.xlu0 %455
  %v459 = vmul.f32 %v422, %v454
  %v460 = vmul.f32 %v424, %v456
  %463 = vrot.lane.b32.xlu0 %v459, 122
  %v464 = vpop.permute.xlu0 %463
  %465 = vrot.lane.b32.xlu0 %v460, 122
  %v466 = vpop.permute.xlu0 %465
  %469 = vst.msk [vmem:[%s4 + $0x2] sm:$0x1] %vm183, %v464
  %470 = vst.msk [vmem:[%s4 + $0xa] sm:$0x1] %vm183, %v466
  %v471 = vld [vmem:[%s0 + $0x3] sm:$0x1]
  %v472 = vld [vmem:[%s0 + $0xb] sm:$0x1]
  %v473 = vrot.slane %v460, 7
  %v474 = vsel %vm189, %v473, %v459
  %475 = vrot.lane.b32.xlu0 %v474, 122
  %v476 = vpop.permute.xlu0 %475
  %v477 = vsel %vm35, %v476, 0
  %479 = vmatprep.subr.mxu0 0.0
  %480 = vmatpush1.msra.mxu0 %v41
  %481 = vmatprep.subr.mxu0 0.0
  %482 = vmatpush1.msra.mxu0 0.0
  %483 = vmatprep.subr.mxu0 0.0
  %484 = vmatpush1.msra.mxu0 0.0
  %485 = vmatprep.subr.mxu0 0.0
  %486 = vmatpush1.msra.mxu0 0.0
  %487 = vmatprep.subr.mxu0 0.0
  %488 = vmatpush1.msra.mxu0 0.0
  %489 = vmatprep.subr.mxu0 0.0
  %490 = vmatpush1.msra.mxu0 0.0
  %491 = vmatprep.subr.mxu0 0.0
  %492 = vmatpush1.msra.mxu0 0.0
  %493 = vmatprep.subr.mxu0 0.0
  %494 = vmatpush1.msra.mxu0 0.0
  %495 = vmatprep.subr.mxu0 0.0
  %496 = vmatpush1.msra.mxu0 0.0
  %497 = vmatprep.subr.mxu0 0.0
  %498 = vmatpush1.msra.mxu0 0.0
  %499 = vmatprep.subr.mxu0 0.0
  %500 = vmatpush1.msra.mxu0 0.0
  %501 = vmatprep.subr.mxu0 0.0
  %502 = vmatpush1.msra.mxu0 0.0
  %503 = vmatprep.subr.mxu0 0.0
  %504 = vmatpush1.msra.mxu0 0.0
  %505 = vmatprep.subr.mxu0 0.0
  %506 = vmatpush1.msra.mxu0 0.0
  %507 = vmatprep.subr.mxu0 0.0
  %508 = vmatpush1.msra.mxu0 0.0
  %509 = vmatprep.subr.mxu0 0.0
  %510 = vmatpush1.msra.mxu0 0.0
  %511 = vmatprep.subr.mxu0 0.0
  %512 = vmatpush1.msra.mxu0 0.0
  %513 = vmatprep.subr.mxu0 0.0
  %514 = vmatpush1.msra.mxu0 0.0
  %515 = vmatprep.subr.mxu0 0.0
  %516 = vmatpush1.msra.mxu0 0.0
  %517 = vmatprep.subr.mxu0 0.0
  %518 = vmatpush1.msra.mxu0 0.0
  %519 = vmatprep.subr.mxu0 0.0
  %520 = vmatpush1.msra.mxu0 0.0
  %521 = vmatprep.subr.mxu0 0.0
  %522 = vmatpush1.msra.mxu0 0.0
  %523 = vmatprep.subr.mxu0 0.0
  %524 = vmatpush1.msra.mxu0 0.0
  %525 = vmatprep.subr.mxu0 0.0
  %526 = vmatpush1.msra.mxu0 0.0
  %527 = vmatprep.subr.mxu0 0.0
  %528 = vmatpush1.msra.mxu0 0.0
  %529 = vmatprep.subr.mxu0 0.0
  %530 = vmatpush1.msra.mxu0 0.0
  %531 = vmatprep.subr.mxu0 0.0
  %532 = vmatpush1.msra.mxu0 0.0
  %533 = vmatprep.subr.mxu0 0.0
  %534 = vmatpush1.msra.mxu0 0.0
  %535 = vmatprep.subr.mxu0 0.0
  %536 = vmatpush1.msra.mxu0 0.0
  %537 = vmatprep.subr.mxu0 0.0
  %538 = vmatpush1.msra.mxu0 0.0
  %539 = vmatprep.subr.mxu0 0.0
  %540 = vmatpush1.msra.mxu0 0.0
  %541 = vmatprep.subr.mxu0 0.0
  %542 = vmatpush1.msra.mxu0 0.0
  %543 = vmatprep.mubr.f32.mxu0 0.0
  %544 = vmatmul.mubr.f32.gmra.mrb[0].mxu0 %v477
  %v545 = vpop.f32.mrb[0].mxu0
  %v546 = vadd.f32 0.0, %v545
  %v547 = vpop.f32.mrb[0].mxu0
  %548 = vdwg.mxu0
  %v550 = vrot.slane %v546, 1
  %v553 = vadd.f32 %v471, %v546
  %v554 = vadd.f32 %v472, %v550
  %v555 = vxor.u32 %v553, 2147483648
  %v556 = vxor.u32 %v554, 2147483648
  %v557 = vmul.f32 %v555, 1.442695
  %v558 = vpow.pop %v557
  %v559 = vmul.f32 %v556, 1.442695
  %v560 = vpow.pop %v559
  %v561 = vadd.f32 %v558, 1.0
  %v562 = vadd.f32 %v560, 1.0
  %v563 = vrcp.pop %v561
  %v564 = vmul.f32 1.0, %v563
  %v565 = vrcp.pop %v562
  %v566 = vmul.f32 1.0, %v565
  %v567 = vtanh.pop %v553
  %v568 = vtanh.pop %v554
  %v569 = vmul.f32 %v564, %v447
  %v570 = vmul.f32 %v566, %v448
  %573 = vrot.lane.b32.xlu0 %v567, 124
  %v574 = vpop.permute.xlu0 %573
  %575 = vrot.lane.b32.xlu0 %v568, 124
  %v576 = vpop.permute.xlu0 %575
  %v579 = vmul.f32 %v564, %v574
  %v580 = vmul.f32 %v566, %v576
  %583 = vrot.lane.b32.xlu0 %v579, 2
  %v584 = vpop.permute.xlu0 %583
  %585 = vrot.lane.b32.xlu0 %v580, 2
  %v586 = vpop.permute.xlu0 %585
  %v589 = vadd.f32 %v569, %v584
  %v590 = vadd.f32 %v570, %v586
  %v591 = vtanh.pop %v589
  %v592 = vtanh.pop %v590
  %595 = vrot.lane.b32.xlu0 %v591, 4
  %v596 = vpop.permute.xlu0 %595
  %597 = vrot.lane.b32.xlu0 %v592, 4
  %v598 = vpop.permute.xlu0 %597
  %v601 = vmul.f32 %v564, %v596
  %v602 = vmul.f32 %v566, %v598
  %605 = vrot.lane.b32.xlu0 %v601, 122
  %v606 = vpop.permute.xlu0 %605
  %607 = vrot.lane.b32.xlu0 %v602, 122
  %v608 = vpop.permute.xlu0 %607
  %611 = vst.msk [vmem:[%s4 + $0x3] sm:$0x1] %vm183, %v606
  %612 = vst.msk [vmem:[%s4 + $0xb] sm:$0x1] %vm183, %v608
  %v613 = vld [vmem:[%s0 + $0x4] sm:$0x1]
  %v614 = vld [vmem:[%s0 + $0xc] sm:$0x1]
  %v615 = vrot.slane %v602, 7
  %v616 = vsel %vm189, %v615, %v601
  %617 = vrot.lane.b32.xlu0 %v616, 122
  %v618 = vpop.permute.xlu0 %617
  %v619 = vsel %vm35, %v618, 0
  %621 = vmatprep.subr.mxu0 0.0
  %622 = vmatpush1.msra.mxu0 %v41
  %623 = vmatprep.subr.mxu0 0.0
  %624 = vmatpush1.msra.mxu0 0.0
  %625 = vmatprep.subr.mxu0 0.0
  %626 = vmatpush1.msra.mxu0 0.0
  %627 = vmatprep.subr.mxu0 0.0
  %628 = vmatpush1.msra.mxu0 0.0
  %629 = vmatprep.subr.mxu0 0.0
  %630 = vmatpush1.msra.mxu0 0.0
  %631 = vmatprep.subr.mxu0 0.0
  %632 = vmatpush1.msra.mxu0 0.0
  %633 = vmatprep.subr.mxu0 0.0
  %634 = vmatpush1.msra.mxu0 0.0
  %635 = vmatprep.subr.mxu0 0.0
  %636 = vmatpush1.msra.mxu0 0.0
  %637 = vmatprep.subr.mxu0 0.0
  %638 = vmatpush1.msra.mxu0 0.0
  %639 = vmatprep.subr.mxu0 0.0
  %640 = vmatpush1.msra.mxu0 0.0
  %641 = vmatprep.subr.mxu0 0.0
  %642 = vmatpush1.msra.mxu0 0.0
  %643 = vmatprep.subr.mxu0 0.0
  %644 = vmatpush1.msra.mxu0 0.0
  %645 = vmatprep.subr.mxu0 0.0
  %646 = vmatpush1.msra.mxu0 0.0
  %647 = vmatprep.subr.mxu0 0.0
  %648 = vmatpush1.msra.mxu0 0.0
  %649 = vmatprep.subr.mxu0 0.0
  %650 = vmatpush1.msra.mxu0 0.0
  %651 = vmatprep.subr.mxu0 0.0
  %652 = vmatpush1.msra.mxu0 0.0
  %653 = vmatprep.subr.mxu0 0.0
  %654 = vmatpush1.msra.mxu0 0.0
  %655 = vmatprep.subr.mxu0 0.0
  %656 = vmatpush1.msra.mxu0 0.0
  %657 = vmatprep.subr.mxu0 0.0
  %658 = vmatpush1.msra.mxu0 0.0
  %659 = vmatprep.subr.mxu0 0.0
  %660 = vmatpush1.msra.mxu0 0.0
  %661 = vmatprep.subr.mxu0 0.0
  %662 = vmatpush1.msra.mxu0 0.0
  %663 = vmatprep.subr.mxu0 0.0
  %664 = vmatpush1.msra.mxu0 0.0
  %665 = vmatprep.subr.mxu0 0.0
  %666 = vmatpush1.msra.mxu0 0.0
  %667 = vmatprep.subr.mxu0 0.0
  %668 = vmatpush1.msra.mxu0 0.0
  %669 = vmatprep.subr.mxu0 0.0
  %670 = vmatpush1.msra.mxu0 0.0
  %671 = vmatprep.subr.mxu0 0.0
  %672 = vmatpush1.msra.mxu0 0.0
  %673 = vmatprep.subr.mxu0 0.0
  %674 = vmatpush1.msra.mxu0 0.0
  %675 = vmatprep.subr.mxu0 0.0
  %676 = vmatpush1.msra.mxu0 0.0
  %677 = vmatprep.subr.mxu0 0.0
  %678 = vmatpush1.msra.mxu0 0.0
  %679 = vmatprep.subr.mxu0 0.0
  %680 = vmatpush1.msra.mxu0 0.0
  %681 = vmatprep.subr.mxu0 0.0
  %682 = vmatpush1.msra.mxu0 0.0
  %683 = vmatprep.subr.mxu0 0.0
  %684 = vmatpush1.msra.mxu0 0.0
  %685 = vmatprep.mubr.f32.mxu0 0.0
  %686 = vmatmul.mubr.f32.gmra.mrb[0].mxu0 %v619
  %v687 = vpop.f32.mrb[0].mxu0
  %v688 = vadd.f32 0.0, %v687
  %v689 = vpop.f32.mrb[0].mxu0
  %690 = vdwg.mxu0
  %v692 = vrot.slane %v688, 1
  %v695 = vadd.f32 %v613, %v688
  %v696 = vadd.f32 %v614, %v692
  %v697 = vxor.u32 %v695, 2147483648
  %v698 = vxor.u32 %v696, 2147483648
  %v699 = vmul.f32 %v697, 1.442695
  %v700 = vpow.pop %v699
  %v701 = vmul.f32 %v698, 1.442695
  %v702 = vpow.pop %v701
  %v703 = vadd.f32 %v700, 1.0
  %v704 = vadd.f32 %v702, 1.0
  %v705 = vrcp.pop %v703
  %v706 = vmul.f32 1.0, %v705
  %v707 = vrcp.pop %v704
  %v708 = vmul.f32 1.0, %v707
  %v709 = vtanh.pop %v695
  %v710 = vtanh.pop %v696
  %v711 = vmul.f32 %v706, %v589
  %v712 = vmul.f32 %v708, %v590
  %715 = vrot.lane.b32.xlu0 %v709, 124
  %v716 = vpop.permute.xlu0 %715
  %717 = vrot.lane.b32.xlu0 %v710, 124
  %v718 = vpop.permute.xlu0 %717
  %v721 = vmul.f32 %v706, %v716
  %v722 = vmul.f32 %v708, %v718
  %725 = vrot.lane.b32.xlu0 %v721, 2
  %v726 = vpop.permute.xlu0 %725
  %727 = vrot.lane.b32.xlu0 %v722, 2
  %v728 = vpop.permute.xlu0 %727
  %v731 = vadd.f32 %v711, %v726
  %v732 = vadd.f32 %v712, %v728
  %v733 = vtanh.pop %v731
  %v734 = vtanh.pop %v732
  %737 = vrot.lane.b32.xlu0 %v733, 4
  %v738 = vpop.permute.xlu0 %737
  %739 = vrot.lane.b32.xlu0 %v734, 4
  %v740 = vpop.permute.xlu0 %739
  %v743 = vmul.f32 %v706, %v738
  %v744 = vmul.f32 %v708, %v740
  %747 = vrot.lane.b32.xlu0 %v743, 122
  %v748 = vpop.permute.xlu0 %747
  %749 = vrot.lane.b32.xlu0 %v744, 122
  %v750 = vpop.permute.xlu0 %749
  %753 = vst.msk [vmem:[%s4 + $0x4] sm:$0x1] %vm183, %v748
  %754 = vst.msk [vmem:[%s4 + $0xc] sm:$0x1] %vm183, %v750
  %v755 = vld [vmem:[%s0 + $0x5] sm:$0x1]
  %v756 = vld [vmem:[%s0 + $0xd] sm:$0x1]
  %v757 = vrot.slane %v744, 7
  %v758 = vsel %vm189, %v757, %v743
  %759 = vrot.lane.b32.xlu0 %v758, 122
  %v760 = vpop.permute.xlu0 %759
  %v761 = vsel %vm35, %v760, 0
  %763 = vmatprep.subr.mxu0 0.0
  %764 = vmatpush1.msra.mxu0 %v41
  %765 = vmatprep.subr.mxu0 0.0
  %766 = vmatpush1.msra.mxu0 0.0
  %767 = vmatprep.subr.mxu0 0.0
  %768 = vmatpush1.msra.mxu0 0.0
  %769 = vmatprep.subr.mxu0 0.0
  %770 = vmatpush1.msra.mxu0 0.0
  %771 = vmatprep.subr.mxu0 0.0
  %772 = vmatpush1.msra.mxu0 0.0
  %773 = vmatprep.subr.mxu0 0.0
  %774 = vmatpush1.msra.mxu0 0.0
  %775 = vmatprep.subr.mxu0 0.0
  %776 = vmatpush1.msra.mxu0 0.0
  %777 = vmatprep.subr.mxu0 0.0
  %778 = vmatpush1.msra.mxu0 0.0
  %779 = vmatprep.subr.mxu0 0.0
  %780 = vmatpush1.msra.mxu0 0.0
  %781 = vmatprep.subr.mxu0 0.0
  %782 = vmatpush1.msra.mxu0 0.0
  %783 = vmatprep.subr.mxu0 0.0
  %784 = vmatpush1.msra.mxu0 0.0
  %785 = vmatprep.subr.mxu0 0.0
  %786 = vmatpush1.msra.mxu0 0.0
  %787 = vmatprep.subr.mxu0 0.0
  %788 = vmatpush1.msra.mxu0 0.0
  %789 = vmatprep.subr.mxu0 0.0
  %790 = vmatpush1.msra.mxu0 0.0
  %791 = vmatprep.subr.mxu0 0.0
  %792 = vmatpush1.msra.mxu0 0.0
  %793 = vmatprep.subr.mxu0 0.0
  %794 = vmatpush1.msra.mxu0 0.0
  %795 = vmatprep.subr.mxu0 0.0
  %796 = vmatpush1.msra.mxu0 0.0
  %797 = vmatprep.subr.mxu0 0.0
  %798 = vmatpush1.msra.mxu0 0.0
  %799 = vmatprep.subr.mxu0 0.0
  %800 = vmatpush1.msra.mxu0 0.0
  %801 = vmatprep.subr.mxu0 0.0
  %802 = vmatpush1.msra.mxu0 0.0
  %803 = vmatprep.subr.mxu0 0.0
  %804 = vmatpush1.msra.mxu0 0.0
  %805 = vmatprep.subr.mxu0 0.0
  %806 = vmatpush1.msra.mxu0 0.0
  %807 = vmatprep.subr.mxu0 0.0
  %808 = vmatpush1.msra.mxu0 0.0
  %809 = vmatprep.subr.mxu0 0.0
  %810 = vmatpush1.msra.mxu0 0.0
  %811 = vmatprep.subr.mxu0 0.0
  %812 = vmatpush1.msra.mxu0 0.0
  %813 = vmatprep.subr.mxu0 0.0
  %814 = vmatpush1.msra.mxu0 0.0
  %815 = vmatprep.subr.mxu0 0.0
  %816 = vmatpush1.msra.mxu0 0.0
  %817 = vmatprep.subr.mxu0 0.0
  %818 = vmatpush1.msra.mxu0 0.0
  %819 = vmatprep.subr.mxu0 0.0
  %820 = vmatpush1.msra.mxu0 0.0
  %821 = vmatprep.subr.mxu0 0.0
  %822 = vmatpush1.msra.mxu0 0.0
  %823 = vmatprep.subr.mxu0 0.0
  %824 = vmatpush1.msra.mxu0 0.0
  %825 = vmatprep.subr.mxu0 0.0
  %826 = vmatpush1.msra.mxu0 0.0
  %827 = vmatprep.mubr.f32.mxu0 0.0
  %828 = vmatmul.mubr.f32.gmra.mrb[0].mxu0 %v761
  %v829 = vpop.f32.mrb[0].mxu0
  %v830 = vadd.f32 0.0, %v829
  %v831 = vpop.f32.mrb[0].mxu0
  %832 = vdwg.mxu0
  %v834 = vrot.slane %v830, 1
  %v837 = vadd.f32 %v755, %v830
  %v838 = vadd.f32 %v756, %v834
  %v839 = vxor.u32 %v837, 2147483648
  %v840 = vxor.u32 %v838, 2147483648
  %v841 = vmul.f32 %v839, 1.442695
  %v842 = vpow.pop %v841
  %v843 = vmul.f32 %v840, 1.442695
  %v844 = vpow.pop %v843
  %v845 = vadd.f32 %v842, 1.0
  %v846 = vadd.f32 %v844, 1.0
  %v847 = vrcp.pop %v845
  %v848 = vmul.f32 1.0, %v847
  %v849 = vrcp.pop %v846
  %v850 = vmul.f32 1.0, %v849
  %v851 = vtanh.pop %v837
  %v852 = vtanh.pop %v838
  %v853 = vmul.f32 %v848, %v731
  %v854 = vmul.f32 %v850, %v732
  %857 = vrot.lane.b32.xlu0 %v851, 124
  %v858 = vpop.permute.xlu0 %857
  %859 = vrot.lane.b32.xlu0 %v852, 124
  %v860 = vpop.permute.xlu0 %859
  %v863 = vmul.f32 %v848, %v858
  %v864 = vmul.f32 %v850, %v860
  %867 = vrot.lane.b32.xlu0 %v863, 2
  %v868 = vpop.permute.xlu0 %867
  %869 = vrot.lane.b32.xlu0 %v864, 2
  %v870 = vpop.permute.xlu0 %869
  %v873 = vadd.f32 %v853, %v868
  %v874 = vadd.f32 %v854, %v870
  %v875 = vtanh.pop %v873
  %v876 = vtanh.pop %v874
  %879 = vrot.lane.b32.xlu0 %v875, 4
  %v880 = vpop.permute.xlu0 %879
  %881 = vrot.lane.b32.xlu0 %v876, 4
  %v882 = vpop.permute.xlu0 %881
  %v885 = vmul.f32 %v848, %v880
  %v886 = vmul.f32 %v850, %v882
  %889 = vrot.lane.b32.xlu0 %v885, 122
  %v890 = vpop.permute.xlu0 %889
  %891 = vrot.lane.b32.xlu0 %v886, 122
  %v892 = vpop.permute.xlu0 %891
  %895 = vst.msk [vmem:[%s4 + $0x5] sm:$0x1] %vm183, %v890
  %896 = vst.msk [vmem:[%s4 + $0xd] sm:$0x1] %vm183, %v892
  %v897 = vld [vmem:[%s0 + $0x6] sm:$0x1]
  %v898 = vld [vmem:[%s0 + $0xe] sm:$0x1]
  %v899 = vrot.slane %v886, 7
  %v900 = vsel %vm189, %v899, %v885
  %901 = vrot.lane.b32.xlu0 %v900, 122
  %v902 = vpop.permute.xlu0 %901
  %v903 = vsel %vm35, %v902, 0
  %905 = vmatprep.subr.mxu0 0.0
  %906 = vmatpush1.msra.mxu0 %v41
  %907 = vmatprep.subr.mxu0 0.0
  %908 = vmatpush1.msra.mxu0 0.0
  %909 = vmatprep.subr.mxu0 0.0
  %910 = vmatpush1.msra.mxu0 0.0
  %911 = vmatprep.subr.mxu0 0.0
  %912 = vmatpush1.msra.mxu0 0.0
  %913 = vmatprep.subr.mxu0 0.0
  %914 = vmatpush1.msra.mxu0 0.0
  %915 = vmatprep.subr.mxu0 0.0
  %916 = vmatpush1.msra.mxu0 0.0
  %917 = vmatprep.subr.mxu0 0.0
  %918 = vmatpush1.msra.mxu0 0.0
  %919 = vmatprep.subr.mxu0 0.0
  %920 = vmatpush1.msra.mxu0 0.0
  %921 = vmatprep.subr.mxu0 0.0
  %922 = vmatpush1.msra.mxu0 0.0
  %923 = vmatprep.subr.mxu0 0.0
  %924 = vmatpush1.msra.mxu0 0.0
  %925 = vmatprep.subr.mxu0 0.0
  %926 = vmatpush1.msra.mxu0 0.0
  %927 = vmatprep.subr.mxu0 0.0
  %928 = vmatpush1.msra.mxu0 0.0
  %929 = vmatprep.subr.mxu0 0.0
  %930 = vmatpush1.msra.mxu0 0.0
  %931 = vmatprep.subr.mxu0 0.0
  %932 = vmatpush1.msra.mxu0 0.0
  %933 = vmatprep.subr.mxu0 0.0
  %934 = vmatpush1.msra.mxu0 0.0
  %935 = vmatprep.subr.mxu0 0.0
  %936 = vmatpush1.msra.mxu0 0.0
  %937 = vmatprep.subr.mxu0 0.0
  %938 = vmatpush1.msra.mxu0 0.0
  %939 = vmatprep.subr.mxu0 0.0
  %940 = vmatpush1.msra.mxu0 0.0
  %941 = vmatprep.subr.mxu0 0.0
  %942 = vmatpush1.msra.mxu0 0.0
  %943 = vmatprep.subr.mxu0 0.0
  %944 = vmatpush1.msra.mxu0 0.0
  %945 = vmatprep.subr.mxu0 0.0
  %946 = vmatpush1.msra.mxu0 0.0
  %947 = vmatprep.subr.mxu0 0.0
  %948 = vmatpush1.msra.mxu0 0.0
  %949 = vmatprep.subr.mxu0 0.0
  %950 = vmatpush1.msra.mxu0 0.0
  %951 = vmatprep.subr.mxu0 0.0
  %952 = vmatpush1.msra.mxu0 0.0
  %953 = vmatprep.subr.mxu0 0.0
  %954 = vmatpush1.msra.mxu0 0.0
  %955 = vmatprep.subr.mxu0 0.0
  %956 = vmatpush1.msra.mxu0 0.0
  %957 = vmatprep.subr.mxu0 0.0
  %958 = vmatpush1.msra.mxu0 0.0
  %959 = vmatprep.subr.mxu0 0.0
  %960 = vmatpush1.msra.mxu0 0.0
  %961 = vmatprep.subr.mxu0 0.0
  %962 = vmatpush1.msra.mxu0 0.0
  %963 = vmatprep.subr.mxu0 0.0
  %964 = vmatpush1.msra.mxu0 0.0
  %965 = vmatprep.subr.mxu0 0.0
  %966 = vmatpush1.msra.mxu0 0.0
  %967 = vmatprep.subr.mxu0 0.0
  %968 = vmatpush1.msra.mxu0 0.0
  %969 = vmatprep.mubr.f32.mxu0 0.0
  %970 = vmatmul.mubr.f32.gmra.mrb[0].mxu0 %v903
  %v971 = vpop.f32.mrb[0].mxu0
  %v972 = vadd.f32 0.0, %v971
  %v973 = vpop.f32.mrb[0].mxu0
  %974 = vdwg.mxu0
  %v976 = vrot.slane %v972, 1
  %v979 = vadd.f32 %v897, %v972
  %v980 = vadd.f32 %v898, %v976
  %v981 = vxor.u32 %v979, 2147483648
  %v982 = vxor.u32 %v980, 2147483648
  %v983 = vmul.f32 %v981, 1.442695
  %v984 = vpow.pop %v983
  %v985 = vmul.f32 %v982, 1.442695
  %v986 = vpow.pop %v985
  %v987 = vadd.f32 %v984, 1.0
  %v988 = vadd.f32 %v986, 1.0
  %v989 = vrcp.pop %v987
  %v990 = vmul.f32 1.0, %v989
  %v991 = vrcp.pop %v988
  %v992 = vmul.f32 1.0, %v991
  %v993 = vtanh.pop %v979
  %v994 = vtanh.pop %v980
  %v995 = vmul.f32 %v990, %v873
  %v996 = vmul.f32 %v992, %v874
  %999 = vrot.lane.b32.xlu0 %v993, 124
  %v1000 = vpop.permute.xlu0 %999
  %1001 = vrot.lane.b32.xlu0 %v994, 124
  %v1002 = vpop.permute.xlu0 %1001
  %v1005 = vmul.f32 %v990, %v1000
  %v1006 = vmul.f32 %v992, %v1002
  %1009 = vrot.lane.b32.xlu0 %v1005, 2
  %v1010 = vpop.permute.xlu0 %1009
  %1011 = vrot.lane.b32.xlu0 %v1006, 2
  %v1012 = vpop.permute.xlu0 %1011
  %v1015 = vadd.f32 %v995, %v1010
  %v1016 = vadd.f32 %v996, %v1012
  %v1017 = vtanh.pop %v1015
  %v1018 = vtanh.pop %v1016
  %1021 = vrot.lane.b32.xlu0 %v1017, 4
  %v1022 = vpop.permute.xlu0 %1021
  %1023 = vrot.lane.b32.xlu0 %v1018, 4
  %v1024 = vpop.permute.xlu0 %1023
  %v1027 = vmul.f32 %v990, %v1022
  %v1028 = vmul.f32 %v992, %v1024
  %1031 = vrot.lane.b32.xlu0 %v1027, 122
  %v1032 = vpop.permute.xlu0 %1031
  %1033 = vrot.lane.b32.xlu0 %v1028, 122
  %v1034 = vpop.permute.xlu0 %1033
  %1037 = vst.msk [vmem:[%s4 + $0x6] sm:$0x1] %vm183, %v1032
  %1038 = vst.msk [vmem:[%s4 + $0xe] sm:$0x1] %vm183, %v1034
  %v1039 = vld [vmem:[%s0 + $0x7] sm:$0x1]
  %v1040 = vld [vmem:[%s0 + $0xf] sm:$0x1]
  %v1041 = vrot.slane %v1028, 7
  %v1042 = vsel %vm189, %v1041, %v1027
  %1043 = vrot.lane.b32.xlu0 %v1042, 122
  %v1044 = vpop.permute.xlu0 %1043
  %v1045 = vsel %vm35, %v1044, 0
  %1047 = vmatprep.subr.mxu0 0.0
  %1048 = vmatpush1.msra.mxu0 %v41
  %1049 = vmatprep.subr.mxu0 0.0
  %1050 = vmatpush1.msra.mxu0 0.0
  %1051 = vmatprep.subr.mxu0 0.0
  %1052 = vmatpush1.msra.mxu0 0.0
  %1053 = vmatprep.subr.mxu0 0.0
  %1054 = vmatpush1.msra.mxu0 0.0
  %1055 = vmatprep.subr.mxu0 0.0
  %1056 = vmatpush1.msra.mxu0 0.0
  %1057 = vmatprep.subr.mxu0 0.0
  %1058 = vmatpush1.msra.mxu0 0.0
  %1059 = vmatprep.subr.mxu0 0.0
  %1060 = vmatpush1.msra.mxu0 0.0
  %1061 = vmatprep.subr.mxu0 0.0
  %1062 = vmatpush1.msra.mxu0 0.0
  %1063 = vmatprep.subr.mxu0 0.0
  %1064 = vmatpush1.msra.mxu0 0.0
  %1065 = vmatprep.subr.mxu0 0.0
  %1066 = vmatpush1.msra.mxu0 0.0
  %1067 = vmatprep.subr.mxu0 0.0
  %1068 = vmatpush1.msra.mxu0 0.0
  %1069 = vmatprep.subr.mxu0 0.0
  %1070 = vmatpush1.msra.mxu0 0.0
  %1071 = vmatprep.subr.mxu0 0.0
  %1072 = vmatpush1.msra.mxu0 0.0
  %1073 = vmatprep.subr.mxu0 0.0
  %1074 = vmatpush1.msra.mxu0 0.0
  %1075 = vmatprep.subr.mxu0 0.0
  %1076 = vmatpush1.msra.mxu0 0.0
  %1077 = vmatprep.subr.mxu0 0.0
  %1078 = vmatpush1.msra.mxu0 0.0
  %1079 = vmatprep.subr.mxu0 0.0
  %1080 = vmatpush1.msra.mxu0 0.0
  %1081 = vmatprep.subr.mxu0 0.0
  %1082 = vmatpush1.msra.mxu0 0.0
  %1083 = vmatprep.subr.mxu0 0.0
  %1084 = vmatpush1.msra.mxu0 0.0
  %1085 = vmatprep.subr.mxu0 0.0
  %1086 = vmatpush1.msra.mxu0 0.0
  %1087 = vmatprep.subr.mxu0 0.0
  %1088 = vmatpush1.msra.mxu0 0.0
  %1089 = vmatprep.subr.mxu0 0.0
  %1090 = vmatpush1.msra.mxu0 0.0
  %1091 = vmatprep.subr.mxu0 0.0
  %1092 = vmatpush1.msra.mxu0 0.0
  %1093 = vmatprep.subr.mxu0 0.0
  %1094 = vmatpush1.msra.mxu0 0.0
  %1095 = vmatprep.subr.mxu0 0.0
  %1096 = vmatpush1.msra.mxu0 0.0
  %1097 = vmatprep.subr.mxu0 0.0
  %1098 = vmatpush1.msra.mxu0 0.0
  %1099 = vmatprep.subr.mxu0 0.0
  %1100 = vmatpush1.msra.mxu0 0.0
  %1101 = vmatprep.subr.mxu0 0.0
  %1102 = vmatpush1.msra.mxu0 0.0
  %1103 = vmatprep.subr.mxu0 0.0
  %1104 = vmatpush1.msra.mxu0 0.0
  %1105 = vmatprep.subr.mxu0 0.0
  %1106 = vmatpush1.msra.mxu0 0.0
  %1107 = vmatprep.subr.mxu0 0.0
  %1108 = vmatpush1.msra.mxu0 0.0
  %1109 = vmatprep.subr.mxu0 0.0
  %1110 = vmatpush1.msra.mxu0 0.0
  %1111 = vmatprep.mubr.f32.mxu0 0.0
  %1112 = vmatmul.mubr.f32.gmra.mrb[0].mxu0 %v1045
  %v1113 = vpop.f32.mrb[0].mxu0
  %v1114 = vadd.f32 0.0, %v1113
  %v1115 = vpop.f32.mrb[0].mxu0
  %1116 = vdwg.mxu0
  %v1118 = vrot.slane %v1114, 1
  %v1121 = vadd.f32 %v1039, %v1114
  %v1122 = vadd.f32 %v1040, %v1118
  %v1123 = vxor.u32 %v1121, 2147483648
  %v1124 = vxor.u32 %v1122, 2147483648
  %v1125 = vmul.f32 %v1123, 1.442695
  %v1126 = vpow.pop %v1125
  %v1127 = vmul.f32 %v1124, 1.442695
  %v1128 = vpow.pop %v1127
  %v1129 = vadd.f32 %v1126, 1.0
  %v1130 = vadd.f32 %v1128, 1.0
  %v1131 = vrcp.pop %v1129
  %v1132 = vmul.f32 1.0, %v1131
  %v1133 = vrcp.pop %v1130
  %v1134 = vmul.f32 1.0, %v1133
  %v1135 = vtanh.pop %v1121
  %v1136 = vtanh.pop %v1122
  %v1137 = vmul.f32 %v1132, %v1015
  %v1138 = vmul.f32 %v1134, %v1016
  %1141 = vrot.lane.b32.xlu0 %v1135, 124
  %v1142 = vpop.permute.xlu0 %1141
  %1143 = vrot.lane.b32.xlu0 %v1136, 124
  %v1144 = vpop.permute.xlu0 %1143
  %v1147 = vmul.f32 %v1132, %v1142
  %v1148 = vmul.f32 %v1134, %v1144
  %1151 = vrot.lane.b32.xlu0 %v1147, 2
  %v1152 = vpop.permute.xlu0 %1151
  %1153 = vrot.lane.b32.xlu0 %v1148, 2
  %v1154 = vpop.permute.xlu0 %1153
  %v1157 = vadd.f32 %v1137, %v1152
  %v1158 = vadd.f32 %v1138, %v1154
  %v1159 = vtanh.pop %v1157
  %v1160 = vtanh.pop %v1158
  %1163 = vrot.lane.b32.xlu0 %v1159, 4
  %v1164 = vpop.permute.xlu0 %1163
  %1165 = vrot.lane.b32.xlu0 %v1160, 4
  %v1166 = vpop.permute.xlu0 %1165
  %v1169 = vmul.f32 %v1132, %v1164
  %v1170 = vmul.f32 %v1134, %v1166
  %1173 = vrot.lane.b32.xlu0 %v1169, 122
  %v1174 = vpop.permute.xlu0 %1173
  %1175 = vrot.lane.b32.xlu0 %v1170, 122
  %v1176 = vpop.permute.xlu0 %1175
  %1179 = vst.msk [vmem:[%s4 + $0x7] sm:$0x1] %vm183, %v1174
  %1180 = vst.msk [vmem:[%s4 + $0xf] sm:$0x1] %vm183, %v1176
  %v1181 = vrot.slane %v1170, 7
  %v1182 = vsel %vm189, %v1181, %v1169
  %1183 = vrot.lane.b32.xlu0 %v1182, 122
  %v1184 = vpop.permute.xlu0 %1183
  %vm1186 = vcmask 9216
  %1187 = vst.msk [vmem:[#allocation2] sm:$0x3] %vm1186, %v1184
  %v1190 = vrot.slane %v1158, 7
  %v1191 = vsel %vm189, %v1190, %v1157
  %1192 = vrot.lane.b32.xlu0 %v1191, 126
  %v1193 = vpop.permute.xlu0 %1192
  %1195 = vst.msk [vmem:[#allocation3] sm:$0x3] %vm1186, %v1193
  // Predicated region
  $region22: #{lstm_forward.1} parent=0 // pred_check
    %p1196 = pneg %p21
  $region23: #{lstm_forward.1} parent=0 // pred_check_branch
    %1198 = sbr.rel (%p1196) target = $region25
  $region24: #{lstm_forward.1} parent=0 // pred_region
    %v1199 = vld [vmem:[%s2] sm:$0x3]
    %v1200 = vld [vmem:[#allocation4] sm:$0x1]
    %v1202 = vlaneseq
    %v1203 = vshrl.u32 %v1202, 7
    %v1204 = vsub.s32 0, %v1203
    %v1205 = vrot.slane %v1200, %v1204
    %v1207 = vsel %vm35, %v1184, 0
    %v1210 = vsel %vm39, %v1199, 0
    %1212 = vmatprep.subr.mxu0 0.0
    %1213 = vmatpush1.msra.mxu0 %v1210
    %1214 = vmatprep.subr.mxu0 0.0
    %1215 = vmatpush1.msra.mxu0 0.0
    %1216 = vmatprep.subr.mxu0 0.0
    %1217 = vmatpush1.msra.mxu0 0.0
    %1218 = vmatprep.subr.mxu0 0.0
    %1219 = vmatpush1.msra.mxu0 0.0
    %1220 = vmatprep.subr.mxu0 0.0
    %1221 = vmatpush1.msra.mxu0 0.0
    %1222 = vmatprep.subr.mxu0 0.0
    %1223 = vmatpush1.msra.mxu0 0.0
    %1224 = vmatprep.subr.mxu0 0.0
    %1225 = vmatpush1.msra.mxu0 0.0
    %1226 = vmatprep.subr.mxu0 0.0
    %1227 = vmatpush1.msra.mxu0 0.0
    %1228 = vmatprep.subr.mxu0 0.0
    %1229 = vmatpush1.msra.mxu0 0.0
    %1230 = vmatprep.subr.mxu0 0.0
    %1231 = vmatpush1.msra.mxu0 0.0
    %1232 = vmatprep.subr.mxu0 0.0
    %1233 = vmatpush1.msra.mxu0 0.0
    %1234 = vmatprep.subr.mxu0 0.0
    %1235 = vmatpush1.msra.mxu0 0.0
    %1236 = vmatprep.subr.mxu0 0.0
    %1237 = vmatpush1.msra.mxu0 0.0
    %1238 = vmatprep.subr.mxu0 0.0
    %1239 = vmatpush1.msra.mxu0 0.0
    %1240 = vmatprep.subr.mxu0 0.0
    %1241 = vmatpush1.msra.mxu0 0.0
    %1242 = vmatprep.subr.mxu0 0.0
    %1243 = vmatpush1.msra.mxu0 0.0
    %1244 = vmatprep.subr.mxu0 0.0
    %1245 = vmatpush1.msra.mxu0 0.0
    %1246 = vmatprep.subr.mxu0 0.0
    %1247 = vmatpush1.msra.mxu0 0.0
    %1248 = vmatprep.subr.mxu0 0.0
    %1249 = vmatpush1.msra.mxu0 0.0
    %1250 = vmatprep.subr.mxu0 0.0
    %1251 = vmatpush1.msra.mxu0 0.0
    %1252 = vmatprep.subr.mxu0 0.0
    %1253 = vmatpush1.msra.mxu0 0.0
    %1254 = vmatprep.subr.mxu0 0.0
    %1255 = vmatpush1.msra.mxu0 0.0
    %1256 = vmatprep.subr.mxu0 0.0
    %1257 = vmatpush1.msra.mxu0 0.0
    %1258 = vmatprep.subr.mxu0 0.0
    %1259 = vmatpush1.msra.mxu0 0.0
    %1260 = vmatprep.subr.mxu0 0.0
    %1261 = vmatpush1.msra.mxu0 0.0
    %1262 = vmatprep.subr.mxu0 0.0
    %1263 = vmatpush1.msra.mxu0 0.0
    %1264 = vmatprep.subr.mxu0 0.0
    %1265 = vmatpush1.msra.mxu0 0.0
    %1266 = vmatprep.subr.mxu0 0.0
    %1267 = vmatpush1.msra.mxu0 0.0
    %1268 = vmatprep.subr.mxu0 0.0
    %1269 = vmatpush1.msra.mxu0 0.0
    %1270 = vmatprep.subr.mxu0 0.0
    %1271 = vmatpush1.msra.mxu0 0.0
    %1272 = vmatprep.subr.mxu0 0.0
    %1273 = vmatpush1.msra.mxu0 0.0
    %1274 = vmatprep.subr.mxu0 0.0
    %1275 = vmatpush1.msra.mxu0 0.0
    %1276 = vmatprep.mubr.f32.mxu0 0.0
    %1277 = vmatmul.mubr.f32.gmra.mrb[0].mxu0 %v1207
    %v1278 = vpop.f32.mrb[0].mxu0
    %v1279 = vadd.f32 %v1205, %v1278
    %v1280 = vpop.f32.mrb[0].mxu0
    %1281 = vdwg.mxu0
    %vm1282 = vcmask 1024
    %1283 = vst.msk [vmem:[%s5] sm:$0x3] %vm1282, %v1279
  $region25: #{lstm_forward.1} parent=0 // pred_fallthru
    _
  // Predicated region
  $region26: #{lstm_forward.1} parent=0 // pred_check
    _
  $region27: #{lstm_forward.1} parent=0 // pred_check_branch
    %1285 = sbr.rel (0) target = $region29
  $region28: #{lstm_forward.1} parent=0 // pred_region
    _
  $region29: #{lstm_forward.1} parent=0 // pred_fallthru
    _
  // Predicated region
  $region30: #{lstm_forward.1} parent=0 // pred_check
    _
  $region31: #{lstm_forward.1} parent=0 // pred_check_branch
    %1287 = sbr.rel (0) target = $region33
  $region32: #{lstm_forward.1} parent=0 // pred_region
    _
  $region33: #{lstm_forward.1} parent=0 // pred_fallthru
    _
  // Predicated region
  $region34: #{lstm_forward.1} parent=0 // pred_check
    _
  $region35: #{lstm_forward.1} parent=0 // pred_check_branch
    %1289 = sbr.rel (0) target = $region37
  $region36: #{lstm_forward.1} parent=0 // pred_region
    _
  $region37: #{lstm_forward.1} parent=0 // pred_fallthru
    _
  // Predicated region
  $region38: #{lstm_forward.1} parent=0 // pred_check
    _
  $region39: #{lstm_forward.1} parent=0 // pred_check_branch
    %1291 = sbr.rel (0) target = $region41
  $region40: #{lstm_forward.1} parent=0 // pred_region
    _
  $region41: #{lstm_forward.1} parent=0 // pred_fallthru
    _

</llo_original>
